<compile_context>
chip_gen: v7x
topology: tpu7x:2x2x1
jax: 0.10.0
libtpu: 0.0.40
codegen_flags: <defaults>
</compile_context>

<pallas_src>
import math
from functools import partial

import jax
import jax.numpy as jnp
from jax.experimental import pallas as pl
from jax.experimental.pallas import tpu as pltpu


# --------------------------------------------------------------------------
# In-kernel math helpers
# --------------------------------------------------------------------------
def _erf(x, *, approx):
    # Abramowitz & Stegun 7.1.26 rational approximation (|abs err| < 1.5e-7),
    # matching PyTorch's exact (erf-based) nn.GELU() closely.
    p = 0.3275911
    a1, a2, a3, a4, a5 = (0.254829592, -0.284496736, 1.421413741,
                          -1.453152027, 1.061405429)
    sgn = jnp.where(x >= 0.0, 1.0, -1.0)
    z = jnp.abs(x)
    denom = 1.0 + p * z
    # EUP approx reciprocal only on the bf16 path; exact divide for f32
    # validation so the approximation error does not compound.
    t = pl.reciprocal(denom, approx=True) if approx else 1.0 / denom
    poly = ((((a5 * t + a4) * t + a3) * t + a2) * t + a1) * t
    return sgn * (1.0 - poly * jnp.exp(-z * z))


def _gelu_exact(x, *, approx):
    # nn.GELU() default = exact erf formulation.
    return 0.5 * x * (1.0 + _erf(x * (1.0 / math.sqrt(2.0)), approx=approx))


# --------------------------------------------------------------------------
# Shared kernel tail: attention (given q and projected kv) + LN2 + FFN.
# --------------------------------------------------------------------------
def _attention_ffn_tail(xq, q, kv, wo_ref, g2_ref, be2_ref, w1_ref, b1_ref,
                        w2_ref, b2_ref, out_ref, oheads_ref, *, head_num,
                        approx):
    f32 = jnp.float32
    mm = wo_ref.dtype                         # matmul input dtype (bf16 / f32)
    tq, D = xq.shape
    S = kv.shape[0]
    dh = D // head_num
    scale = 1.0 / math.sqrt(dh)

    k = kv[:, :D]                             # (S, D), mm dtype
    v = kv[:, D:]                             # (S, D), mm dtype

    # Per-head scores / softmax / PV.  Each head's (tq, dh) output is written
    # to a static lane offset of the (tq, D) scratch; a SINGLE (tq,D)@(D,D)
    # output projection follows (full MXU fill, no per-head K=dh matmuls).
    for h in range(head_num):                 # head_num is small -> full unroll
        lo = h * dh
        qh = q[:, lo:lo + dh].astype(mm)
        kh = k[:, lo:lo + dh]
        vh = v[:, lo:lo + dh]
        # q·kᵀ without materializing a K transpose: contract dim 1 of both.
        s = jax.lax.dot_general(qh, kh, (((1,), (1,)), ((), ())),
                                preferred_element_type=f32) * scale  # (tq, S)
        s = s - jnp.max(s, axis=-1, keepdims=True)
        e = jnp.exp(s)
        denom = jnp.sum(e, axis=-1, keepdims=True)
        p = e * pl.reciprocal(denom, approx=True) if approx else e / denom
        oh = jnp.dot(p.astype(mm), vh, preferred_element_type=f32)   # (tq, dh)
        oheads_ref[:, lo:lo + dh] = oh.astype(mm)

    attn = jnp.dot(oheads_ref[...], wo_ref[...],
                   preferred_element_type=f32)                        # (tq, D)

    x1 = attn + xq                            # residual 1 (f32)

    # LayerNorm 2 (eps=1e-5, biased variance, affine), f32.
    mean = jnp.mean(x1, axis=-1, keepdims=True)
    var = jnp.mean(jnp.square(x1 - mean), axis=-1, keepdims=True)
    xn = (x1 - mean) * jax.lax.rsqrt(var + 1e-5)
    xn = xn * g2_ref[0] + be2_ref[0]

    # FeedForward: Linear(D -> 2D) -> exact GELU -> Linear(2D -> D).
    h1 = jnp.dot(xn.astype(mm), w1_ref[...],
                 preferred_element_type=f32) + b1_ref[0]
    h1 = _gelu_exact(h1, approx=approx)
    ff = jnp.dot(h1.astype(mm), w2_ref[...],
                 preferred_element_type=f32) + b2_ref[0]

    out_ref[0] = (ff + x1).astype(out_ref.dtype)   # residual 2


# --------------------------------------------------------------------------
# Kernel bodies
# --------------------------------------------------------------------------
def _transblock_kernel_single(x_ref, wqkv_ref, wo_ref, g2_ref, be2_ref,
                              w1_ref, b1_ref, w2_ref, b2_ref, out_ref,
                              oheads_ref, *, head_num, approx):
    # Single q-tile (tq == S): one fused QKV matmul, x read exactly once.
    f32 = jnp.float32
    mm = wqkv_ref.dtype
    D = x_ref.shape[-1]

    # NOTE: layer_norm_1's output is discarded by the reference forward
    # (MHA consumes the ORIGINAL x) -> intentionally skipped.
    xq = x_ref[0].astype(f32)                                     # (S, D)
    qkv = jnp.dot(xq.astype(mm), wqkv_ref[...],
                  preferred_element_type=f32)                     # (S, 3D)
    q = qkv[:, :D]
    kv = qkv[:, D:].astype(mm)                                    # (S, 2D)
    _attention_ffn_tail(xq, q, kv, wo_ref, g2_ref, be2_ref, w1_ref, b1_ref,
                        w2_ref, b2_ref, out_ref, oheads_ref,
                        head_num=head_num, approx=approx)


def _transblock_kernel_multi(xq_ref, xkv_ref, wqkv_ref, wo_ref, g2_ref,
                             be2_ref, w1_ref, b1_ref, w2_ref, b2_ref, out_ref,
                             kv_ref, oheads_ref, *, head_num, approx):
    # Multiple q-tiles per batch.  K/V are projected ONCE per batch (q-tile
    # grid axis is "arbitrary", so iterations run in order and the scratch
    # survives across them; the (1,S,D) xkv block index only changes with b,
    # so it is DMA'd once per batch as well).
    f32 = jnp.float32
    mm = wqkv_ref.dtype
    D = xq_ref.shape[-1]

    @pl.when(pl.program_id(1) == 0)
    def _():
        kv = jnp.dot(xkv_ref[0], wqkv_ref[:, D:],
                     preferred_element_type=f32)                  # (S, 2D)
        kv_ref[...] = kv.astype(kv_ref.dtype)

    # layer_norm_1 intentionally skipped (dead in the reference forward).
    xq = xq_ref[0].astype(f32)                                    # (tq, D)
    q = jnp.dot(xq.astype(mm), wqkv_ref[:, :D],
                preferred_element_type=f32)                       # (tq, D)
    _attention_ffn_tail(xq, q, kv_ref[...], wo_ref, g2_ref, be2_ref, w1_ref,
                        b1_ref, w2_ref, b2_ref, out_ref, oheads_ref,
                        head_num=head_num, approx=approx)


# --------------------------------------------------------------------------
# Host-side wrapper
# --------------------------------------------------------------------------
def _tpu_vmem_capacity_bytes():
    try:
        info = pltpu.get_tpu_info()
        cap = getattr(info, "vmem_capacity_bytes", None)
        if cap:
            return int(cap)
    except Exception:
        pass
    return 128 * 1024 * 1024


def _device_kind():
    try:
        return jax.devices()[0].device_kind.lower()
    except Exception:
        return ""


def transblock_forward(x, params, head_num, *, matmul_dtype=jnp.bfloat16,
                       q_tile=None):
    B, S, D = x.shape
    assert D % head_num == 0, "dim must be divisible by head_num"
    Hid = 2 * D
    f32 = jnp.float32
    approx = jnp.dtype(matmul_dtype) != jnp.dtype(jnp.float32)

    # One-time weight prep (free layout plumbing, done once in the wrapper):
    #  - transpose every nn.Linear weight to [in, out],
    #  - fuse Wq/Wk/Wv into a single (D, 3D) QKV weight,
    #  - cast matmul weights to bf16 (accumulation stays f32 in-kernel).
    wqkv_t = jnp.concatenate(
        [params["wq"].T, params["wk"].T, params["wv"].T], axis=1
    ).astype(matmul_dtype)                                    # (D, 3D)
    wo_t = params["wo"].T.astype(matmul_dtype)                # (D, D)
    w1_t = params["w1"].T.astype(matmul_dtype)                # (D, 2D)
    w2_t = params["w2"].T.astype(matmul_dtype)                # (2D, D)
    g2 = params["g2"].astype(f32)                             # (1, D)
    be2 = params["be2"].astype(f32)                           # (1, D)
    b1 = params["b1"].astype(f32)                             # (1, 2D)
    b2 = params["b2"].astype(f32)                             # (1, D)

    weight_args = (wqkv_t, wo_t, g2, be2, w1_t, b1, w2_t, b2)
    mm_bytes = jnp.dtype(matmul_dtype).itemsize
    wbytes = (3 * D * D + D * D + D * Hid + Hid * D) * mm_bytes \
        + (D + D + Hid + D) * 4

    vmem_cap = _tpu_vmem_capacity_bytes()
    kind = _device_kind()
    mxu_m = 256 if any(t in kind for t in ("v6", "v7", "7x", "trillium")) else 128

    def _est_bytes(tq, double_buf_weights):
        w = wbytes * (2 if double_buf_weights else 1)
        io = 2 * tq * D * x.dtype.itemsize            # xq tile (double-buffered)
        io += 2 * tq * D * x.dtype.itemsize           # out tile (double-buffered)
        scr = tq * D * mm_bytes                       # per-head output scratch
        if tq < S:
            io += 2 * S * D * mm_bytes                # bf16 K/V copy of x
            scr += S * 2 * D * mm_bytes               # persistent KV scratch
        tmp = 4 * (3 * tq * D + 2 * tq * S + 2 * tq * Hid + 6 * tq * D)
        if tq < S:
            tmp += 4 * 2 * S * D                      # transient f32 KV matmul
        return w + io + scr + tmp

    def _fits(tq):
        return int(1.5 * _est_bytes(tq, False)) <= int(0.9 * vmem_cap)

    # Query-tile selection (chip- and VMEM-aware).
    if q_tile is not None:
        assert S % q_tile == 0 and (q_tile % 8 == 0 or q_tile == S)
        tq = q_tile
    else:
        tq = None
        if mxu_m == 256 and S % 256 == 0 and _fits(256):
            tq = 256                                   # fill 256-deep MXU rows
        if tq is None and S % 128 == 0 and _fits(128):
            tq = 128
        if tq is None:
            for cand in range((min(512, S) // 8) * 8, 0, -8):
                if S % cand == 0 and _fits(cand):
                    tq = cand
                    break
        if tq is None:
            tq = S      # tiny / awkward S; block == full dim is always legal
    n_qt = S // tq
    single = n_qt == 1

    def _vmem_limit(double_buf_weights):
        need = int(1.5 * _est_bytes(tq, double_buf_weights))
        return int(min(max(need, 32 * 1024 * 1024), int(0.9 * vmem_cap)))

    def _call(single_buffer_weights):
        grid_rank = 1 if single else 2

        def wspec(shape):
            nd = len(shape)
            if grid_rank == 1:
                imap = lambda b, _n=nd: (0,) * _n
            else:
                imap = lambda b, i, _n=nd: (0,) * _n
            if single_buffer_weights:
                # Constant-index weights never change across the grid: a
                # single VMEM buffer halves their footprint (matters most on
                # v7x's 64 MiB VMEM).
                return pl.BlockSpec(shape, imap,
                                    pipeline_mode=pl.Buffered(buffer_count=1))
            return pl.BlockSpec(shape, imap)

        weight_specs = [wspec(a.shape) for a in weight_args]

        if single:
            # No second x input: xkv would be dead when tq == S.
            in_specs = [pl.BlockSpec((1, S, D), lambda b: (b, 0, 0))] + weight_specs
            out_spec = pl.BlockSpec((1, S, D), lambda b: (b, 0, 0))
            return pl.pallas_call(
                partial(_transblock_kernel_single, head_num=head_num,
                        approx=approx),
                out_shape=jax.ShapeDtypeStruct((B, S, D), x.dtype),
                grid_spec=pltpu.PrefetchScalarGridSpec(
                    num_scalar_prefetch=0,
                    grid=(B,),
                    in_specs=in_specs,
                    out_specs=out_spec,
                    scratch_shapes=[pltpu.VMEM((S, D), matmul_dtype)]),
                compiler_params=pltpu.CompilerParams(
                    dimension_semantics=("parallel",),
                    vmem_limit_bytes=_vmem_limit(not single_buffer_weights)),
            )(x, *weight_args)

        # Multi-tile path: K/V copy of x is cast once in the wrapper to the
        # matmul dtype (halves the largest per-batch DMA); the q tile stays
        # f32 for the residual.
        x_kv = x.astype(matmul_dtype)
        in_specs = [pl.BlockSpec((1, tq, D), lambda b, i: (b, i, 0)),
                    pl.BlockSpec((1, S, D), lambda b, i: (b, 0, 0))] + weight_specs
        out_spec = pl.BlockSpec((1, tq, D), lambda b, i: (b, i, 0))
        return pl.pallas_call(
            partial(_transblock_kernel_multi, head_num=head_num,
                    approx=approx),
            out_shape=jax.ShapeDtypeStruct((B, S, D), x.dtype),
            grid_spec=pltpu.PrefetchScalarGridSpec(
                num_scalar_prefetch=0,
                grid=(B, n_qt),
                in_specs=in_specs,
                out_specs=out_spec,
                scratch_shapes=[pltpu.VMEM((S, 2 * D), matmul_dtype),  # KV
                                pltpu.VMEM((tq, D), matmul_dtype)]),   # heads
            compiler_params=pltpu.CompilerParams(
                # q-tile axis "arbitrary": sequential per batch so the KV
                # scratch initialized at i==0 is valid for i>0.
                dimension_semantics=("parallel", "arbitrary"),
                vmem_limit_bytes=_vmem_limit(not single_buffer_weights)),
        )(x, x_kv, *weight_args)

    try:
        return _call(True)
    except (AttributeError, TypeError, ValueError, NotImplementedError,
            pltpu.LoweringException):
        # JAX builds without BlockSpec(pipeline_mode=)/pl.Buffered(1) support:
        # retry with default double-buffered weights (vmem limit re-sized).
        return _call(False)


# --------------------------------------------------------------------------
# Pure-JAX (f32) reference mirroring the PyTorch forward exactly.
# --------------------------------------------------------------------------
def transblock_reference(x, params, head_num):
    B, S, D = x.shape
    dh = D // head_num
    x0 = x
    q = x0 @ params["wq"].T
    k = x0 @ params["wk"].T
    v = x0 @ params["wv"].T

    def split(t):
        return t.reshape(B, S, head_num, dh).transpose(0, 2, 1, 3)

    q, k, v = split(q), split(k), split(v)
    s = jnp.einsum("bhqd,bhkd->bhqk", q, k) / math.sqrt(dh)
    p = jax.nn.softmax(s, axis=-1)
    o = jnp.einsum("bhqk,bhkd->bhqd", p, v)
    o = o.transpose(0, 2, 1, 3).reshape(B, S, D)
    attn = o @ params["wo"].T
    x1 = attn + x0
    mean = x1.mean(-1, keepdims=True)
    var = ((x1 - mean) ** 2).mean(-1, keepdims=True)
    xn = (x1 - mean) / jnp.sqrt(var + 1e-5) * params["g2"][0] + params["be2"][0]
    h1 = xn @ params["w1"].T + params["b1"][0]
    h1 = 0.5 * h1 * (1.0 + jax.scipy.special.erf(h1 / math.sqrt(2.0)))
    ff = h1 @ params["w2"].T + params["b2"][0]
    return ff + x1


if __name__ == "__main__":
    B, S, D, H = 2, 8, 32, 4

    key = jax.random.PRNGKey(0)
    keys = jax.random.split(key, 12)
    scale = 0.05
    params = {
        "wq": scale * jax.random.normal(keys[0], (D, D), jnp.float32),
        "wk": scale * jax.random.normal(keys[1], (D, D), jnp.float32),
        "wv": scale * jax.random.normal(keys[2], (D, D), jnp.float32),
        "wo": scale * jax.random.normal(keys[3], (D, D), jnp.float32),
        "g2": 1.0 + 0.1 * jax.random.normal(keys[4], (1, D), jnp.float32),
        "be2": 0.1 * jax.random.normal(keys[5], (1, D), jnp.float32),
        "w1": scale * jax.random.normal(keys[6], (2 * D, D), jnp.float32),
        "b1": 0.1 * jax.random.normal(keys[7], (1, 2 * D), jnp.float32),
        "w2": scale * jax.random.normal(keys[8], (D, 2 * D), jnp.float32),
        "b2": 0.1 * jax.random.normal(keys[9], (1, D), jnp.float32),
    }
    x = jax.random.normal(keys[10], (B, S, D), jnp.float32)

    ref = jax.block_until_ready(transblock_reference(x, params, H))

    # 1) Structural check with f32 matmuls (exact divides in erf/softmax).
    out_f32 = jax.block_until_ready(
        transblock_forward(x, params, H, matmul_dtype=jnp.float32))
    assert out_f32.shape == (B, S, D)
    if not jnp.allclose(out_f32, ref, atol=1e-2, rtol=1e-2):
        max_err = float(jnp.max(jnp.abs(out_f32 - ref)))
        raise AssertionError(f"f32 kernel mismatch vs reference, max abs err = {max_err}")

    # 2) Production configuration: bf16 matmul inputs, f32 accumulation.
    out = jax.block_until_ready(transblock_forward(x, params, H))
    assert out.shape == (B, S, D)
    if not jnp.allclose(out, ref, atol=3e-2, rtol=3e-2):
        max_err = float(jnp.max(jnp.abs(out - ref)))
        raise AssertionError(f"bf16 kernel mismatch vs reference, max abs err = {max_err}")

    # 3) Multi-q-tile path (K/V-once-per-batch scratch + fused Wo) at S=16,
    #    forced tq=8 so the scratch/"arbitrary"-axis code path is exercised.
    S2 = 16
    x2 = jax.random.normal(keys[11], (B, S2, D), jnp.float32)
    ref2 = jax.block_until_ready(transblock_reference(x2, params, H))
    out2 = jax.block_until_ready(transblock_forward(x2, params, H, q_tile=8))
    assert out2.shape == (B, S2, D)
    if not jnp.allclose(out2, ref2, atol=3e-2, rtol=3e-2):
        max_err = float(jnp.max(jnp.abs(out2 - ref2)))
        raise AssertionError(f"multi-tile kernel mismatch vs reference, max abs err = {max_err}")

    print("KERNEL_OK")
</pallas_src>

<mosaic_0001>
module attributes {stable_mosaic.version = 11 : i64} {
  func.func @_transblock_kernel_single(%arg0: i32, %arg1: memref<1x8x32xf32, #tpu.memory_space<vmem>>, %arg2: memref<32x96xf32, #tpu.memory_space<vmem>>, %arg3: memref<32x32xf32, #tpu.memory_space<vmem>>, %arg4: memref<1x32xf32, #tpu.memory_space<vmem>>, %arg5: memref<1x32xf32, #tpu.memory_space<vmem>>, %arg6: memref<32x64xf32, #tpu.memory_space<vmem>>, %arg7: memref<1x64xf32, #tpu.memory_space<vmem>>, %arg8: memref<64x32xf32, #tpu.memory_space<vmem>>, %arg9: memref<1x32xf32, #tpu.memory_space<vmem>>, %arg10: memref<1x8x32xf32, #tpu.memory_space<vmem>>, %arg11: memref<8x32xf32, #tpu.memory_space<vmem>>) attributes {dimension_semantics = [#tpu.dimension_semantics<parallel>], iteration_bounds = array<i64: 2>, scalar_prefetch = 0 : i64, scratch_operands = 1 : i64, tpu.core_type = #tpu.core_type<tc>, window_params = [{transform_indices = @transform_0, window_bounds = array<i64: 1, 8, 32>}, {pipeline_mode = #tpu.pipeline_mode<synchronous>, transform_indices = @transform_1, window_bounds = array<i64: 32, 96>}, {pipeline_mode = #tpu.pipeline_mode<synchronous>, transform_indices = @transform_2, window_bounds = array<i64: 32, 32>}, {pipeline_mode = #tpu.pipeline_mode<synchronous>, transform_indices = @transform_3, window_bounds = array<i64: 1, 32>}, {pipeline_mode = #tpu.pipeline_mode<synchronous>, transform_indices = @transform_4, window_bounds = array<i64: 1, 32>}, {pipeline_mode = #tpu.pipeline_mode<synchronous>, transform_indices = @transform_5, window_bounds = array<i64: 32, 64>}, {pipeline_mode = #tpu.pipeline_mode<synchronous>, transform_indices = @transform_6, window_bounds = array<i64: 1, 64>}, {pipeline_mode = #tpu.pipeline_mode<synchronous>, transform_indices = @transform_7, window_bounds = array<i64: 64, 32>}, {pipeline_mode = #tpu.pipeline_mode<synchronous>, transform_indices = @transform_8, window_bounds = array<i64: 1, 32>}, {transform_indices = @transform_9, window_bounds = array<i64: 1, 8, 32>}]} {
    %c0 = arith.constant 0 : index
    %c0_0 = arith.constant 0 : index
    %c0_1 = arith.constant 0 : index
    %0 = vector.load %arg1[%c0, %c0_0, %c0_1] : memref<1x8x32xf32, #tpu.memory_space<vmem>>, vector<1x8x32xf32>
    %1 = vector.shape_cast %0 : vector<1x8x32xf32> to vector<8x32xf32>
    %c0_2 = arith.constant 0 : index
    %c0_3 = arith.constant 0 : index
    %2 = vector.load %arg2[%c0_2, %c0_3] : memref<32x96xf32, #tpu.memory_space<vmem>>, vector<32x96xf32>
    %cst = arith.constant dense<0.000000e+00> : vector<8x96xf32>
    %3 = tpu.matmul %1, %2, %cst {dimension_numbers = #tpu.dot_dimension_numbers<[1], [0], [0], [1], [0, 0, 1, 1], [], []>} : vector<8x32xf32>, vector<32x96xf32>, vector<8x96xf32> -> vector<8x96xf32>
    %4 = vector.extract_strided_slice %3 {offsets = [0, 0], sizes = [8, 32], strides = [1, 1]} : vector<8x96xf32> to vector<8x32xf32>
    %5 = vector.extract_strided_slice %3 {offsets = [0, 32], sizes = [8, 64], strides = [1, 1]} : vector<8x96xf32> to vector<8x64xf32>
    %6 = vector.extract_strided_slice %5 {offsets = [0, 0], sizes = [8, 32], strides = [1, 1]} : vector<8x64xf32> to vector<8x32xf32>
    %7 = vector.extract_strided_slice %5 {offsets = [0, 32], sizes = [8, 32], strides = [1, 1]} : vector<8x64xf32> to vector<8x32xf32>
    %8 = vector.extract_strided_slice %4 {offsets = [0, 0], sizes = [8, 8], strides = [1, 1]} : vector<8x32xf32> to vector<8x8xf32>
    %9 = vector.extract_strided_slice %6 {offsets = [0, 0], sizes = [8, 8], strides = [1, 1]} : vector<8x32xf32> to vector<8x8xf32>
    %10 = vector.extract_strided_slice %7 {offsets = [0, 0], sizes = [8, 8], strides = [1, 1]} : vector<8x32xf32> to vector<8x8xf32>
    %cst_4 = arith.constant dense<0.000000e+00> : vector<8x8xf32>
    %11 = tpu.matmul %8, %9, %cst_4 {dimension_numbers = #tpu.dot_dimension_numbers<[1], [1], [0], [0], [0, 0, 1, 0], [], []>} : vector<8x8xf32>, vector<8x8xf32>, vector<8x8xf32> -> vector<8x8xf32>
    %cst_5 = arith.constant 0.353553385 : f32
    %12 = vector.broadcast %cst_5 : f32 to vector<8x8xf32>
    %13 = arith.mulf %11, %12 : vector<8x8xf32>
    %cst_6 = arith.constant dense<0xFF800000> : vector<8xf32>
    %14 = vector.multi_reduction <maximumf>, %13, %cst_6 [1] : vector<8x8xf32> to vector<8xf32>
    %15 = vector.shape_cast %14 : vector<8xf32> to vector<8x1xf32>
    %16 = vector.broadcast %15 : vector<8x1xf32> to vector<8x8xf32>
    %17 = arith.subf %13, %16 : vector<8x8xf32>
    %18 = math.exp %17 : vector<8x8xf32>
    %cst_7 = arith.constant dense<0.000000e+00> : vector<8xf32>
    %19 = vector.multi_reduction <add>, %18, %cst_7 [1] : vector<8x8xf32> to vector<8xf32>
    %20 = vector.shape_cast %19 : vector<8xf32> to vector<8x1xf32>
    %21 = vector.broadcast %20 : vector<8x1xf32> to vector<8x8xf32>
    %22 = arith.divf %18, %21 : vector<8x8xf32>
    %cst_8 = arith.constant dense<0.000000e+00> : vector<8x8xf32>
    %23 = tpu.matmul %22, %10, %cst_8 {dimension_numbers = #tpu.dot_dimension_numbers<[1], [0], [0], [1], [0, 0, 1, 1], [], []>} : vector<8x8xf32>, vector<8x8xf32>, vector<8x8xf32> -> vector<8x8xf32>
    %c0_9 = arith.constant 0 : index
    %c0_10 = arith.constant 0 : index
    %24 = vector.load %arg11[%c0_9, %c0_10] : memref<8x32xf32, #tpu.memory_space<vmem>>, vector<8x8xf32>
    tpu.vector_store %arg11[%c0_9, %c0_10], %23 {strides = array<i32>} : memref<8x32xf32, #tpu.memory_space<vmem>>, vector<8x8xf32>,
    %25 = vector.extract_strided_slice %4 {offsets = [0, 8], sizes = [8, 8], strides = [1, 1]} : vector<8x32xf32> to vector<8x8xf32>
    %26 = vector.extract_strided_slice %6 {offsets = [0, 8], sizes = [8, 8], strides = [1, 1]} : vector<8x32xf32> to vector<8x8xf32>
    %27 = vector.extract_strided_slice %7 {offsets = [0, 8], sizes = [8, 8], strides = [1, 1]} : vector<8x32xf32> to vector<8x8xf32>
    %cst_11 = arith.constant dense<0.000000e+00> : vector<8x8xf32>
    %28 = tpu.matmul %25, %26, %cst_11 {dimension_numbers = #tpu.dot_dimension_numbers<[1], [1], [0], [0], [0, 0, 1, 0], [], []>} : vector<8x8xf32>, vector<8x8xf32>, vector<8x8xf32> -> vector<8x8xf32>
    %cst_12 = arith.constant 0.353553385 : f32
    %29 = vector.broadcast %cst_12 : f32 to vector<8x8xf32>
    %30 = arith.mulf %28, %29 : vector<8x8xf32>
    %cst_13 = arith.constant dense<0xFF800000> : vector<8xf32>
    %31 = vector.multi_reduction <maximumf>, %30, %cst_13 [1] : vector<8x8xf32> to vector<8xf32>
    %32 = vector.shape_cast %31 : vector<8xf32> to vector<8x1xf32>
    %33 = vector.broadcast %32 : vector<8x1xf32> to vector<8x8xf32>
    %34 = arith.subf %30, %33 : vector<8x8xf32>
    %35 = math.exp %34 : vector<8x8xf32>
    %cst_14 = arith.constant dense<0.000000e+00> : vector<8xf32>
    %36 = vector.multi_reduction <add>, %35, %cst_14 [1] : vector<8x8xf32> to vector<8xf32>
    %37 = vector.shape_cast %36 : vector<8xf32> to vector<8x1xf32>
    %38 = vector.broadcast %37 : vector<8x1xf32> to vector<8x8xf32>
    %39 = arith.divf %35, %38 : vector<8x8xf32>
    %cst_15 = arith.constant dense<0.000000e+00> : vector<8x8xf32>
    %40 = tpu.matmul %39, %27, %cst_15 {dimension_numbers = #tpu.dot_dimension_numbers<[1], [0], [0], [1], [0, 0, 1, 1], [], []>} : vector<8x8xf32>, vector<8x8xf32>, vector<8x8xf32> -> vector<8x8xf32>
    %c0_16 = arith.constant 0 : index
    %c8 = arith.constant 8 : index
    %41 = vector.load %arg11[%c0_16, %c8] : memref<8x32xf32, #tpu.memory_space<vmem>>, vector<8x8xf32>
    tpu.vector_store %arg11[%c0_16, %c8], %40 {strides = array<i32>} : memref<8x32xf32, #tpu.memory_space<vmem>>, vector<8x8xf32>,
    %42 = vector.extract_strided_slice %4 {offsets = [0, 16], sizes = [8, 8], strides = [1, 1]} : vector<8x32xf32> to vector<8x8xf32>
    %43 = vector.extract_strided_slice %6 {offsets = [0, 16], sizes = [8, 8], strides = [1, 1]} : vector<8x32xf32> to vector<8x8xf32>
    %44 = vector.extract_strided_slice %7 {offsets = [0, 16], sizes = [8, 8], strides = [1, 1]} : vector<8x32xf32> to vector<8x8xf32>
    %cst_17 = arith.constant dense<0.000000e+00> : vector<8x8xf32>
    %45 = tpu.matmul %42, %43, %cst_17 {dimension_numbers = #tpu.dot_dimension_numbers<[1], [1], [0], [0], [0, 0, 1, 0], [], []>} : vector<8x8xf32>, vector<8x8xf32>, vector<8x8xf32> -> vector<8x8xf32>
    %cst_18 = arith.constant 0.353553385 : f32
    %46 = vector.broadcast %cst_18 : f32 to vector<8x8xf32>
    %47 = arith.mulf %45, %46 : vector<8x8xf32>
    %cst_19 = arith.constant dense<0xFF800000> : vector<8xf32>
    %48 = vector.multi_reduction <maximumf>, %47, %cst_19 [1] : vector<8x8xf32> to vector<8xf32>
    %49 = vector.shape_cast %48 : vector<8xf32> to vector<8x1xf32>
    %50 = vector.broadcast %49 : vector<8x1xf32> to vector<8x8xf32>
    %51 = arith.subf %47, %50 : vector<8x8xf32>
    %52 = math.exp %51 : vector<8x8xf32>
    %cst_20 = arith.constant dense<0.000000e+00> : vector<8xf32>
    %53 = vector.multi_reduction <add>, %52, %cst_20 [1] : vector<8x8xf32> to vector<8xf32>
    %54 = vector.shape_cast %53 : vector<8xf32> to vector<8x1xf32>
    %55 = vector.broadcast %54 : vector<8x1xf32> to vector<8x8xf32>
    %56 = arith.divf %52, %55 : vector<8x8xf32>
    %cst_21 = arith.constant dense<0.000000e+00> : vector<8x8xf32>
    %57 = tpu.matmul %56, %44, %cst_21 {dimension_numbers = #tpu.dot_dimension_numbers<[1], [0], [0], [1], [0, 0, 1, 1], [], []>} : vector<8x8xf32>, vector<8x8xf32>, vector<8x8xf32> -> vector<8x8xf32>
    %c0_22 = arith.constant 0 : index
    %c16 = arith.constant 16 : index
    %58 = vector.load %arg11[%c0_22, %c16] : memref<8x32xf32, #tpu.memory_space<vmem>>, vector<8x8xf32>
    tpu.vector_store %arg11[%c0_22, %c16], %57 {strides = array<i32>} : memref<8x32xf32, #tpu.memory_space<vmem>>, vector<8x8xf32>,
    %59 = vector.extract_strided_slice %4 {offsets = [0, 24], sizes = [8, 8], strides = [1, 1]} : vector<8x32xf32> to vector<8x8xf32>
    %60 = vector.extract_strided_slice %6 {offsets = [0, 24], sizes = [8, 8], strides = [1, 1]} : vector<8x32xf32> to vector<8x8xf32>
    %61 = vector.extract_strided_slice %7 {offsets = [0, 24], sizes = [8, 8], strides = [1, 1]} : vector<8x32xf32> to vector<8x8xf32>
    %cst_23 = arith.constant dense<0.000000e+00> : vector<8x8xf32>
    %62 = tpu.matmul %59, %60, %cst_23 {dimension_numbers = #tpu.dot_dimension_numbers<[1], [1], [0], [0], [0, 0, 1, 0], [], []>} : vector<8x8xf32>, vector<8x8xf32>, vector<8x8xf32> -> vector<8x8xf32>
    %cst_24 = arith.constant 0.353553385 : f32
    %63 = vector.broadcast %cst_24 : f32 to vector<8x8xf32>
    %64 = arith.mulf %62, %63 : vector<8x8xf32>
    %cst_25 = arith.constant dense<0xFF800000> : vector<8xf32>
    %65 = vector.multi_reduction <maximumf>, %64, %cst_25 [1] : vector<8x8xf32> to vector<8xf32>
    %66 = vector.shape_cast %65 : vector<8xf32> to vector<8x1xf32>
    %67 = vector.broadcast %66 : vector<8x1xf32> to vector<8x8xf32>
    %68 = arith.subf %64, %67 : vector<8x8xf32>
    %69 = math.exp %68 : vector<8x8xf32>
    %cst_26 = arith.constant dense<0.000000e+00> : vector<8xf32>
    %70 = vector.multi_reduction <add>, %69, %cst_26 [1] : vector<8x8xf32> to vector<8xf32>
    %71 = vector.shape_cast %70 : vector<8xf32> to vector<8x1xf32>
    %72 = vector.broadcast %71 : vector<8x1xf32> to vector<8x8xf32>
    %73 = arith.divf %69, %72 : vector<8x8xf32>
    %cst_27 = arith.constant dense<0.000000e+00> : vector<8x8xf32>
    %74 = tpu.matmul %73, %61, %cst_27 {dimension_numbers = #tpu.dot_dimension_numbers<[1], [0], [0], [1], [0, 0, 1, 1], [], []>} : vector<8x8xf32>, vector<8x8xf32>, vector<8x8xf32> -> vector<8x8xf32>
    %c0_28 = arith.constant 0 : index
    %c24 = arith.constant 24 : index
    %75 = vector.load %arg11[%c0_28, %c24] : memref<8x32xf32, #tpu.memory_space<vmem>>, vector<8x8xf32>
    tpu.vector_store %arg11[%c0_28, %c24], %74 {strides = array<i32>} : memref<8x32xf32, #tpu.memory_space<vmem>>, vector<8x8xf32>,
    %c0_29 = arith.constant 0 : index
    %c0_30 = arith.constant 0 : index
    %76 = vector.load %arg11[%c0_29, %c0_30] : memref<8x32xf32, #tpu.memory_space<vmem>>, vector<8x32xf32>
    %c0_31 = arith.constant 0 : index
    %c0_32 = arith.constant 0 : index
    %77 = vector.load %arg3[%c0_31, %c0_32] : memref<32x32xf32, #tpu.memory_space<vmem>>, vector<32x32xf32>
    %cst_33 = arith.constant dense<0.000000e+00> : vector<8x32xf32>
    %78 = tpu.matmul %76, %77, %cst_33 {dimension_numbers = #tpu.dot_dimension_numbers<[1], [0], [0], [1], [0, 0, 1, 1], [], []>} : vector<8x32xf32>, vector<32x32xf32>, vector<8x32xf32> -> vector<8x32xf32>
    %79 = arith.addf %78, %1 : vector<8x32xf32>
    %cst_34 = arith.constant dense<0.000000e+00> : vector<8xf32>
    %80 = vector.multi_reduction <add>, %79, %cst_34 [1] : vector<8x32xf32> to vector<8xf32>
    %81 = vector.shape_cast %80 : vector<8xf32> to vector<8x1xf32>
    %cst_35 = arith.constant 3.200000e+01 : f32
    %82 = vector.broadcast %cst_35 : f32 to vector<8x1xf32>
    %83 = arith.divf %81, %82 : vector<8x1xf32>
    %84 = vector.broadcast %83 : vector<8x1xf32> to vector<8x32xf32>
    %85 = arith.subf %79, %84 : vector<8x32xf32>
    %86 = arith.mulf %85, %85 : vector<8x32xf32>
    %cst_36 = arith.constant dense<0.000000e+00> : vector<8xf32>
    %87 = vector.multi_reduction <add>, %86, %cst_36 [1] : vector<8x32xf32> to vector<8xf32>
    %88 = vector.shape_cast %87 : vector<8xf32> to vector<8x1xf32>
    %cst_37 = arith.constant 3.200000e+01 : f32
    %89 = vector.broadcast %cst_37 : f32 to vector<8x1xf32>
    %90 = arith.divf %88, %89 : vector<8x1xf32>
    %91 = vector.broadcast %83 : vector<8x1xf32> to vector<8x32xf32>
    %92 = arith.subf %79, %91 : vector<8x32xf32>
    %cst_38 = arith.constant 9.99999974E-6 : f32
    %93 = vector.broadcast %cst_38 : f32 to vector<8x1xf32>
    %94 = arith.addf %90, %93 : vector<8x1xf32>
    %95 = math.rsqrt %94 : vector<8x1xf32>
    %96 = vector.broadcast %95 : vector<8x1xf32> to vector<8x32xf32>
    %97 = arith.mulf %92, %96 : vector<8x32xf32>
    %c0_39 = arith.constant 0 : index
    %c0_40 = arith.constant 0 : index
    %98 = vector.load %arg4[%c0_39, %c0_40] : memref<1x32xf32, #tpu.memory_space<vmem>>, vector<1x32xf32>
    %99 = vector.shape_cast %98 : vector<1x32xf32> to vector<32xf32>
    %100 = vector.shape_cast %99 : vector<32xf32> to vector<1x32xf32>
    %101 = vector.broadcast %100 : vector<1x32xf32> to vector<8x32xf32>
    %102 = arith.mulf %97, %101 : vector<8x32xf32>
    %c0_41 = arith.constant 0 : index
    %c0_42 = arith.constant 0 : index
    %103 = vector.load %arg5[%c0_41, %c0_42] : memref<1x32xf32, #tpu.memory_space<vmem>>, vector<1x32xf32>
    %104 = vector.shape_cast %103 : vector<1x32xf32> to vector<32xf32>
    %105 = vector.shape_cast %104 : vector<32xf32> to vector<1x32xf32>
    %106 = vector.broadcast %105 : vector<1x32xf32> to vector<8x32xf32>
    %107 = arith.addf %102, %106 : vector<8x32xf32>
    %c0_43 = arith.constant 0 : index
    %c0_44 = arith.constant 0 : index
    %108 = vector.load %arg6[%c0_43, %c0_44] : memref<32x64xf32, #tpu.memory_space<vmem>>, vector<32x64xf32>
    %cst_45 = arith.constant dense<0.000000e+00> : vector<8x64xf32>
    %109 = tpu.matmul %107, %108, %cst_45 {dimension_numbers = #tpu.dot_dimension_numbers<[1], [0], [0], [1], [0, 0, 1, 1], [], []>} : vector<8x32xf32>, vector<32x64xf32>, vector<8x64xf32> -> vector<8x64xf32>
    %c0_46 = arith.constant 0 : index
    %c0_47 = arith.constant 0 : index
    %110 = vector.load %arg7[%c0_46, %c0_47] : memref<1x64xf32, #tpu.memory_space<vmem>>, vector<1x64xf32>
    %111 = vector.shape_cast %110 : vector<1x64xf32> to vector<64xf32>
    %112 = vector.shape_cast %111 : vector<64xf32> to vector<1x64xf32>
    %113 = vector.broadcast %112 : vector<1x64xf32> to vector<8x64xf32>
    %114 = arith.addf %109, %113 : vector<8x64xf32>
    %cst_48 = arith.constant 5.000000e-01 : f32
    %115 = vector.broadcast %cst_48 : f32 to vector<8x64xf32>
    %116 = arith.mulf %115, %114 : vector<8x64xf32>
    %cst_49 = arith.constant 0.707106769 : f32
    %117 = vector.broadcast %cst_49 : f32 to vector<8x64xf32>
    %118 = arith.mulf %114, %117 : vector<8x64xf32>
    %cst_50 = arith.constant 0.000000e+00 : f32
    %119 = vector.broadcast %cst_50 : f32 to vector<8x64xf32>
    %120 = arith.cmpf oge, %118, %119 : vector<8x64xf32>
    %cst_51 = arith.constant 1.000000e+00 : f32
    %cst_52 = arith.constant -1.000000e+00 : f32
    %121 = vector.broadcast %cst_51 : f32 to vector<8x64xf32>
    %122 = vector.broadcast %cst_52 : f32 to vector<8x64xf32>
    %123 = arith.select %120, %121, %122 : vector<8x64xi1>, vector<8x64xf32>
    %124 = math.absf %118 : vector<8x64xf32>
    %cst_53 = arith.constant 0.327591091 : f32
    %125 = vector.broadcast %cst_53 : f32 to vector<8x64xf32>
    %126 = arith.mulf %125, %124 : vector<8x64xf32>
    %cst_54 = arith.constant 1.000000e+00 : f32
    %127 = vector.broadcast %cst_54 : f32 to vector<8x64xf32>
    %128 = arith.addf %127, %126 : vector<8x64xf32>
    %cst_55 = arith.constant 1.000000e+00 : f32
    %129 = vector.broadcast %cst_55 : f32 to vector<8x64xf32>
    %130 = arith.divf %129, %128 : vector<8x64xf32>
    %cst_56 = arith.constant 1.06140542 : f32
    %131 = vector.broadcast %cst_56 : f32 to vector<8x64xf32>
    %132 = arith.mulf %131, %130 : vector<8x64xf32>
    %cst_57 = arith.constant -1.45315206 : f32
    %133 = vector.broadcast %cst_57 : f32 to vector<8x64xf32>
    %134 = arith.addf %132, %133 : vector<8x64xf32>
    %135 = arith.mulf %134, %130 : vector<8x64xf32>
    %cst_58 = arith.constant 1.42141378 : f32
    %136 = vector.broadcast %cst_58 : f32 to vector<8x64xf32>
    %137 = arith.addf %135, %136 : vector<8x64xf32>
    %138 = arith.mulf %137, %130 : vector<8x64xf32>
    %cst_59 = arith.constant -0.284496725 : f32
    %139 = vector.broadcast %cst_59 : f32 to vector<8x64xf32>
    %140 = arith.addf %138, %139 : vector<8x64xf32>
    %141 = arith.mulf %140, %130 : vector<8x64xf32>
    %cst_60 = arith.constant 0.254829586 : f32
    %142 = vector.broadcast %cst_60 : f32 to vector<8x64xf32>
    %143 = arith.addf %141, %142 : vector<8x64xf32>
    %144 = arith.mulf %143, %130 : vector<8x64xf32>
    %cst_61 = arith.constant 0.000000e+00 : f32
    %145 = vector.broadcast %cst_61 : f32 to vector<8x64xf32>
    %146 = arith.subf %145, %124 : vector<8x64xf32>
    %147 = arith.mulf %146, %124 : vector<8x64xf32>
    %148 = math.exp %147 : vector<8x64xf32>
    %149 = arith.mulf %144, %148 : vector<8x64xf32>
    %cst_62 = arith.constant 1.000000e+00 : f32
    %150 = vector.broadcast %cst_62 : f32 to vector<8x64xf32>
    %151 = arith.subf %150, %149 : vector<8x64xf32>
    %152 = arith.mulf %123, %151 : vector<8x64xf32>
    %cst_63 = arith.constant 1.000000e+00 : f32
    %153 = vector.broadcast %cst_63 : f32 to vector<8x64xf32>
    %154 = arith.addf %153, %152 : vector<8x64xf32>
    %155 = arith.mulf %116, %154 : vector<8x64xf32>
    %c0_64 = arith.constant 0 : index
    %c0_65 = arith.constant 0 : index
    %156 = vector.load %arg8[%c0_64, %c0_65] : memref<64x32xf32, #tpu.memory_space<vmem>>, vector<64x32xf32>
    %cst_66 = arith.constant dense<0.000000e+00> : vector<8x32xf32>
    %157 = tpu.matmul %155, %156, %cst_66 {dimension_numbers = #tpu.dot_dimension_numbers<[1], [0], [0], [1], [0, 0, 1, 1], [], []>} : vector<8x64xf32>, vector<64x32xf32>, vector<8x32xf32> -> vector<8x32xf32>
    %c0_67 = arith.constant 0 : index
    %c0_68 = arith.constant 0 : index
    %158 = vector.load %arg9[%c0_67, %c0_68] : memref<1x32xf32, #tpu.memory_space<vmem>>, vector<1x32xf32>
    %159 = vector.shape_cast %158 : vector<1x32xf32> to vector<32xf32>
    %160 = vector.shape_cast %159 : vector<32xf32> to vector<1x32xf32>
    %161 = vector.broadcast %160 : vector<1x32xf32> to vector<8x32xf32>
    %162 = arith.addf %157, %161 : vector<8x32xf32>
    %163 = arith.addf %162, %79 : vector<8x32xf32>
    %c0_69 = arith.constant 0 : index
    %c0_70 = arith.constant 0 : index
    %c0_71 = arith.constant 0 : index
    %164 = vector.load %arg10[%c0_69, %c0_70, %c0_71] : memref<1x8x32xf32, #tpu.memory_space<vmem>>, vector<1x8x32xf32>
    %165 = vector.shape_cast %164 : vector<1x8x32xf32> to vector<8x32xf32>
    %166 = vector.shape_cast %163 : vector<8x32xf32> to vector<1x8x32xf32>
    tpu.vector_store %arg10[%c0_69, %c0_70, %c0_71], %166 {strides = array<i32>} : memref<1x8x32xf32, #tpu.memory_space<vmem>>, vector<1x8x32xf32>,
    return
  }
  func.func @transform_0(%arg0: i32) -> (i32, i32, i32) {
    %c0_i32 = arith.constant 0 : i32
    %c0_i32_0 = arith.constant 0 : i32
    %c0_i32_1 = arith.constant 0 : i32
    return %arg0, %c0_i32, %c0_i32_0 : i32, i32, i32
  }
  func.func @transform_1(%arg0: i32) -> (i32, i32) {
    %c0_i32 = arith.constant 0 : i32
    %c0_i32_0 = arith.constant 0 : i32
    %c0_i32_1 = arith.constant 0 : i32
    return %c0_i32, %c0_i32_0 : i32, i32
  }
  func.func @transform_2(%arg0: i32) -> (i32, i32) {
    %c0_i32 = arith.constant 0 : i32
    %c0_i32_0 = arith.constant 0 : i32
    %c0_i32_1 = arith.constant 0 : i32
    return %c0_i32, %c0_i32_0 : i32, i32
  }
  func.func @transform_3(%arg0: i32) -> (i32, i32) {
    %c0_i32 = arith.constant 0 : i32
    %c0_i32_0 = arith.constant 0 : i32
    %c0_i32_1 = arith.constant 0 : i32
    return %c0_i32, %c0_i32_0 : i32, i32
  }
  func.func @transform_4(%arg0: i32) -> (i32, i32) {
    %c0_i32 = arith.constant 0 : i32
    %c0_i32_0 = arith.constant 0 : i32
    %c0_i32_1 = arith.constant 0 : i32
    return %c0_i32, %c0_i32_0 : i32, i32
  }
  func.func @transform_5(%arg0: i32) -> (i32, i32) {
    %c0_i32 = arith.constant 0 : i32
    %c0_i32_0 = arith.constant 0 : i32
    %c0_i32_1 = arith.constant 0 : i32
    return %c0_i32, %c0_i32_0 : i32, i32
  }
  func.func @transform_6(%arg0: i32) -> (i32, i32) {
    %c0_i32 = arith.constant 0 : i32
    %c0_i32_0 = arith.constant 0 : i32
    %c0_i32_1 = arith.constant 0 : i32
    return %c0_i32, %c0_i32_0 : i32, i32
  }
  func.func @transform_7(%arg0: i32) -> (i32, i32) {
    %c0_i32 = arith.constant 0 : i32
    %c0_i32_0 = arith.constant 0 : i32
    %c0_i32_1 = arith.constant 0 : i32
    return %c0_i32, %c0_i32_0 : i32, i32
  }
  func.func @transform_8(%arg0: i32) -> (i32, i32) {
    %c0_i32 = arith.constant 0 : i32
    %c0_i32_0 = arith.constant 0 : i32
    %c0_i32_1 = arith.constant 0 : i32
    return %c0_i32, %c0_i32_0 : i32, i32
  }
  func.func @transform_9(%arg0: i32) -> (i32, i32, i32) {
    %c0_i32 = arith.constant 0 : i32
    %c0_i32_0 = arith.constant 0 : i32
    %c0_i32_1 = arith.constant 0 : i32
    return %arg0, %c0_i32, %c0_i32_0 : i32, i32, i32
  }
}

</mosaic_0001>

<llo_original>
// kernel: tpu_custom_call.1
$region0: #{tpu_custom_call.1}
  #allocation0 [shape = 'u32[]', space=smem, size = 0x4, offset = 0x4, fixed_abs, tag = 'smem constant byte address 0x4 - core index']
  #allocation1 [shape = 'u32[144,128]{1,0:T(1,128)}', space=vmem, size = 0x12000, scoped, tag = 'internal scratch']
  #allocation2 [shape = 'f32[8,32]{1,0:T(8,128)}', space=vmem, size = 0x1000, scoped, tag = 'scratch operand']
  %s0 = inlined_call_operand.hbm [shape: f32[2,8,32], index: 0, kind: input, shape index: {}]
  %s1 = inlined_call_operand.vmem [shape: f32[32,96], index: 1, kind: input, shape index: {}]
  %s2 = inlined_call_operand.vmem [shape: f32[32,32], index: 2, kind: input, shape index: {}]
  %s3 = inlined_call_operand.vmem [shape: f32[1,32], index: 3, kind: input, shape index: {}]
  %s4 = inlined_call_operand.vmem [shape: f32[1,32], index: 4, kind: input, shape index: {}]
  %s5 = inlined_call_operand.vmem [shape: f32[32,64], index: 5, kind: input, shape index: {}]
  %s6 = inlined_call_operand.vmem [shape: f32[1,64], index: 6, kind: input, shape index: {}]
  %s7 = inlined_call_operand.vmem [shape: f32[64,32], index: 7, kind: input, shape index: {}]
  %s8 = inlined_call_operand.vmem [shape: f32[1,32], index: 8, kind: input, shape index: {}]
  %s9 = inlined_call_operand.hbm [shape: f32[2,8,32], index: 9, kind: output, shape index: {}]
  %s10 = sld [smem:[#allocation0]]
  $region73: #{tpu_custom_call.1} parent=0
    _
  %s12 = ssub.s32 1, %s10
  %s13 = scalar_select 0, %s12, %s10
  $region1: #{tpu_custom_call.1} parent=0
    #allocation3 [shape = 'u8[8192]{0}', space=vmem, size = 0x2000, scoped, tag = 'input window, operand 0']
    #allocation4 [shape = 's32[2]{0}', space=sflag, size = 0x8, scoped, tag = 'scoped memory for tpu_custom_call.1']
    #allocation5 [shape = 's32[2]{0}', space=sflag, size = 0x8, scoped, tag = 'scoped memory for tpu_custom_call.1']
    #allocation6 [shape = 'u8[8192]{0}', space=vmem, size = 0x2000, scoped, tag = 'output window, operand 0']
    %14 = vsyncpa [#allocation4], 0
    %s15 = scalar_lea.sflag [#allocation4], 1
    %16 = vsyncpa %s15, 0
    %17 = vsyncpa [#allocation5], 0
    %s18 = scalar_lea.sflag [#allocation5], 1
    %19 = vsyncpa %s18, 0
    loop: start=0, step=1, limit=4
    $region2: #{tpu_custom_call.1} parent=1 // loop_pre_header
      _
    $region3: #{tpu_custom_call.1} parent=1 // loop_header
      %s21 = sphi 0, %s25
      %p22 = scmp.ge.s32.totalorder %s21, 4
      %s31 = sphi 0, %s33
      %s34 = sphi 0, %s31
      %s35 = sphi 0, %s34
      %s51 = sphi 0, %s35
      %s55 = sphi 0, %s55
      %s57 = sphi 0, %s55
      %s58 = sphi 0, %s57
      %s72 = sphi 0, %s58
      %s76 = sphi 0, %s76
      %s78 = sphi 0, %s76
      %s79 = sphi 0, %s78
      %s93 = sphi 0, %s79
      %s97 = sphi 0, %s97
      %s99 = sphi 0, %s97
      %s100 = sphi 0, %s99
      %s114 = sphi 0, %s100
      %s118 = sphi 0, %s118
      %s120 = sphi 0, %s118
      %s121 = sphi 0, %s120
      %s135 = sphi 0, %s121
      %s139 = sphi 0, %s139
      %s141 = sphi 0, %s139
      %s142 = sphi 0, %s141
      %s156 = sphi 0, %s142
      %s160 = sphi 0, %s160
      %s162 = sphi 0, %s160
      %s163 = sphi 0, %s162
      %s177 = sphi 0, %s163
      %s181 = sphi 0, %s181
      %s183 = sphi 0, %s181
      %s184 = sphi 0, %s183
      %s198 = sphi 0, %s184
      %s202 = sphi 0, %s202
      %s204 = sphi 0, %s202
      %s205 = sphi 0, %s204
      %s219 = sphi 0, %s205
      %s225 = sphi 0, %s227
      %s228 = sphi 0, %s225
      %s229 = sphi 0, %s228
      %s245 = sphi 0, %s229
    $region4: #{tpu_custom_call.1} parent=1 // loop_header_branch
      %24 = sbr.rel (%p22) target = $region8
    $region5: #{tpu_custom_call.1} parent=1 // loop_body
      %s26 = ssub.s32 %s21, 1
      %s27 = ssub.s32 %s21, 2
      %s28 = sadd.s32 %s21, 1
      %s29 = ssub.s32 %s21, %s28
      %p30 = scmp.eq.s32.totalorder %s29, 0
      %s32 = sadd.s32 %s31, 1
      %s33 = scalar_select %p30, %s31, %s32
      %p36 = pneg %p30
      %p37 = scmp.eq.s32.totalorder %s21, 1
      %p38 = por %p36, %p37
      %p39 = scmp.ne.s32.totalorder %s31, %s34
      %p40 = scmp.eq.s32.totalorder %s21, 0
      %p41 = por %p39, %p40
      %p42 = scmp.ne.s32.totalorder %s31, %s34
      %p43 = scmp.eq.s32.totalorder %s26, 1
      %p44 = por %p42, %p43
      %p45 = scmp.ne.s32.totalorder %s34, %s35
      %p46 = scmp.eq.s32.totalorder %s26, 0
      %p47 = por %p45, %p46
      %p48 = scmp.ne.s32.totalorder %s34, %s35
      %p49 = scmp.eq.s32.totalorder %s27, 1
      %p50 = por %p48, %p49
      %p52 = scmp.ne.s32.totalorder %s35, %s51
      %p53 = scmp.eq.s32.totalorder %s27, 0
      %p54 = por %p52, %p53
      %s56 = sadd.s32 %s55, 1
      %p59 = scmp.eq.s32.totalorder %s21, 1
      %p60 = scmp.ne.s32.totalorder %s55, %s57
      %p61 = scmp.eq.s32.totalorder %s21, 0
      %p62 = por %p60, %p61
      %p63 = scmp.ne.s32.totalorder %s55, %s57
      %p64 = scmp.eq.s32.totalorder %s26, 1
      %p65 = por %p63, %p64
      %p66 = scmp.ne.s32.totalorder %s57, %s58
      %p67 = scmp.eq.s32.totalorder %s26, 0
      %p68 = por %p66, %p67
      %p69 = scmp.ne.s32.totalorder %s57, %s58
      %p70 = scmp.eq.s32.totalorder %s27, 1
      %p71 = por %p69, %p70
      %p73 = scmp.ne.s32.totalorder %s58, %s72
      %p74 = scmp.eq.s32.totalorder %s27, 0
      %p75 = por %p73, %p74
      %s77 = sadd.s32 %s76, 1
      %p80 = scmp.eq.s32.totalorder %s21, 1
      %p81 = scmp.ne.s32.totalorder %s76, %s78
      %p82 = scmp.eq.s32.totalorder %s21, 0
      %p83 = por %p81, %p82
      %p84 = scmp.ne.s32.totalorder %s76, %s78
      %p85 = scmp.eq.s32.totalorder %s26, 1
      %p86 = por %p84, %p85
      %p87 = scmp.ne.s32.totalorder %s78, %s79
      %p88 = scmp.eq.s32.totalorder %s26, 0
      %p89 = por %p87, %p88
      %p90 = scmp.ne.s32.totalorder %s78, %s79
      %p91 = scmp.eq.s32.totalorder %s27, 1
      %p92 = por %p90, %p91
      %p94 = scmp.ne.s32.totalorder %s79, %s93
      %p95 = scmp.eq.s32.totalorder %s27, 0
      %p96 = por %p94, %p95
      %s98 = sadd.s32 %s97, 1
      %p101 = scmp.eq.s32.totalorder %s21, 1
      %p102 = scmp.ne.s32.totalorder %s97, %s99
      %p103 = scmp.eq.s32.totalorder %s21, 0
      %p104 = por %p102, %p103
      %p105 = scmp.ne.s32.totalorder %s97, %s99
      %p106 = scmp.eq.s32.totalorder %s26, 1
      %p107 = por %p105, %p106
      %p108 = scmp.ne.s32.totalorder %s99, %s100
      %p109 = scmp.eq.s32.totalorder %s26, 0
      %p110 = por %p108, %p109
      %p111 = scmp.ne.s32.totalorder %s99, %s100
      %p112 = scmp.eq.s32.totalorder %s27, 1
      %p113 = por %p111, %p112
      %p115 = scmp.ne.s32.totalorder %s100, %s114
      %p116 = scmp.eq.s32.totalorder %s27, 0
      %p117 = por %p115, %p116
      %s119 = sadd.s32 %s118, 1
      %p122 = scmp.eq.s32.totalorder %s21, 1
      %p123 = scmp.ne.s32.totalorder %s118, %s120
      %p124 = scmp.eq.s32.totalorder %s21, 0
      %p125 = por %p123, %p124
      %p126 = scmp.ne.s32.totalorder %s118, %s120
      %p127 = scmp.eq.s32.totalorder %s26, 1
      %p128 = por %p126, %p127
      %p129 = scmp.ne.s32.totalorder %s120, %s121
      %p130 = scmp.eq.s32.totalorder %s26, 0
      %p131 = por %p129, %p130
      %p132 = scmp.ne.s32.totalorder %s120, %s121
      %p133 = scmp.eq.s32.totalorder %s27, 1
      %p134 = por %p132, %p133
      %p136 = scmp.ne.s32.totalorder %s121, %s135
      %p137 = scmp.eq.s32.totalorder %s27, 0
      %p138 = por %p136, %p137
      %s140 = sadd.s32 %s139, 1
      %p143 = scmp.eq.s32.totalorder %s21, 1
      %p144 = scmp.ne.s32.totalorder %s139, %s141
      %p145 = scmp.eq.s32.totalorder %s21, 0
      %p146 = por %p144, %p145
      %p147 = scmp.ne.s32.totalorder %s139, %s141
      %p148 = scmp.eq.s32.totalorder %s26, 1
      %p149 = por %p147, %p148
      %p150 = scmp.ne.s32.totalorder %s141, %s142
      %p151 = scmp.eq.s32.totalorder %s26, 0
      %p152 = por %p150, %p151
      %p153 = scmp.ne.s32.totalorder %s141, %s142
      %p154 = scmp.eq.s32.totalorder %s27, 1
      %p155 = por %p153, %p154
      %p157 = scmp.ne.s32.totalorder %s142, %s156
      %p158 = scmp.eq.s32.totalorder %s27, 0
      %p159 = por %p157, %p158
      %s161 = sadd.s32 %s160, 1
      %p164 = scmp.eq.s32.totalorder %s21, 1
      %p165 = scmp.ne.s32.totalorder %s160, %s162
      %p166 = scmp.eq.s32.totalorder %s21, 0
      %p167 = por %p165, %p166
      %p168 = scmp.ne.s32.totalorder %s160, %s162
      %p169 = scmp.eq.s32.totalorder %s26, 1
      %p170 = por %p168, %p169
      %p171 = scmp.ne.s32.totalorder %s162, %s163
      %p172 = scmp.eq.s32.totalorder %s26, 0
      %p173 = por %p171, %p172
      %p174 = scmp.ne.s32.totalorder %s162, %s163
      %p175 = scmp.eq.s32.totalorder %s27, 1
      %p176 = por %p174, %p175
      %p178 = scmp.ne.s32.totalorder %s163, %s177
      %p179 = scmp.eq.s32.totalorder %s27, 0
      %p180 = por %p178, %p179
      %s182 = sadd.s32 %s181, 1
      %p185 = scmp.eq.s32.totalorder %s21, 1
      %p186 = scmp.ne.s32.totalorder %s181, %s183
      %p187 = scmp.eq.s32.totalorder %s21, 0
      %p188 = por %p186, %p187
      %p189 = scmp.ne.s32.totalorder %s181, %s183
      %p190 = scmp.eq.s32.totalorder %s26, 1
      %p191 = por %p189, %p190
      %p192 = scmp.ne.s32.totalorder %s183, %s184
      %p193 = scmp.eq.s32.totalorder %s26, 0
      %p194 = por %p192, %p193
      %p195 = scmp.ne.s32.totalorder %s183, %s184
      %p196 = scmp.eq.s32.totalorder %s27, 1
      %p197 = por %p195, %p196
      %p199 = scmp.ne.s32.totalorder %s184, %s198
      %p200 = scmp.eq.s32.totalorder %s27, 0
      %p201 = por %p199, %p200
      %s203 = sadd.s32 %s202, 1
      %p206 = scmp.eq.s32.totalorder %s21, 1
      %p207 = scmp.ne.s32.totalorder %s202, %s204
      %p208 = scmp.eq.s32.totalorder %s21, 0
      %p209 = por %p207, %p208
      %p210 = scmp.ne.s32.totalorder %s202, %s204
      %p211 = scmp.eq.s32.totalorder %s26, 1
      %p212 = por %p210, %p211
      %p213 = scmp.ne.s32.totalorder %s204, %s205
      %p214 = scmp.eq.s32.totalorder %s26, 0
      %p215 = por %p213, %p214
      %p216 = scmp.ne.s32.totalorder %s204, %s205
      %p217 = scmp.eq.s32.totalorder %s27, 1
      %p218 = por %p216, %p217
      %p220 = scmp.ne.s32.totalorder %s205, %s219
      %p221 = scmp.eq.s32.totalorder %s27, 0
      %p222 = por %p220, %p221
      %s223 = ssub.s32 %s21, %s28
      %p224 = scmp.eq.s32.totalorder %s223, 0
      %s226 = sadd.s32 %s225, 1
      %s227 = scalar_select %p224, %s225, %s226
      %p230 = pneg %p224
      %p231 = scmp.eq.s32.totalorder %s21, 1
      %p232 = por %p230, %p231
      %p233 = scmp.ne.s32.totalorder %s225, %s228
      %p234 = scmp.eq.s32.totalorder %s21, 0
      %p235 = por %p233, %p234
      %p236 = scmp.ne.s32.totalorder %s225, %s228
      %p237 = scmp.eq.s32.totalorder %s26, 1
      %p238 = por %p236, %p237
      %p239 = scmp.ne.s32.totalorder %s228, %s229
      %p240 = scmp.eq.s32.totalorder %s26, 0
      %p241 = por %p239, %p240
      %p242 = scmp.ne.s32.totalorder %s228, %s229
      %p243 = scmp.eq.s32.totalorder %s27, 1
      %p244 = por %p242, %p243
      %p246 = scmp.ne.s32.totalorder %s229, %s245
      %p247 = scmp.eq.s32.totalorder %s27, 0
      %p248 = por %p246, %p247
      %p249 = scmp.le.s32.totalorder 1, %s21
      %p250 = scmp.lt.s32.totalorder %s21, 3
      %p251 = pnand %p249, %p250
      %p252 = pneg %p251
      // Predicated region
      $region9: #{tpu_custom_call.1} parent=5 // pred_check
        _
      $region10: #{tpu_custom_call.1} parent=5 // pred_check_branch
        %254 = sbr.rel (%p251) target = $region12
      $region11: #{tpu_custom_call.1} parent=5 // pred_region
        %s255 = ssub.s32 %s21, 1
        // Predicated region
        $region13: #{tpu_custom_call.1} parent=11 // pred_check
          %p256 = pneg %p68
        $region14: #{tpu_custom_call.1} parent=11 // pred_check_branch
          %258 = sbr.rel (%p256) target = $region16
        $region15: #{tpu_custom_call.1} parent=11 // pred_region
          _
        $region16: #{tpu_custom_call.1} parent=11 // pred_fallthru
          _
        // Predicated region
        $region17: #{tpu_custom_call.1} parent=11 // pred_check
          %p259 = pneg %p89
        $region18: #{tpu_custom_call.1} parent=11 // pred_check_branch
          %261 = sbr.rel (%p259) target = $region20
        $region19: #{tpu_custom_call.1} parent=11 // pred_region
          _
        $region20: #{tpu_custom_call.1} parent=11 // pred_fallthru
          _
        // Predicated region
        $region21: #{tpu_custom_call.1} parent=11 // pred_check
          %p262 = pneg %p110
        $region22: #{tpu_custom_call.1} parent=11 // pred_check_branch
          %264 = sbr.rel (%p262) target = $region24
        $region23: #{tpu_custom_call.1} parent=11 // pred_region
          _
        $region24: #{tpu_custom_call.1} parent=11 // pred_fallthru
          _
        // Predicated region
        $region25: #{tpu_custom_call.1} parent=11 // pred_check
          %p265 = pneg %p131
        $region26: #{tpu_custom_call.1} parent=11 // pred_check_branch
          %267 = sbr.rel (%p265) target = $region28
        $region27: #{tpu_custom_call.1} parent=11 // pred_region
          _
        $region28: #{tpu_custom_call.1} parent=11 // pred_fallthru
          _
        // Predicated region
        $region29: #{tpu_custom_call.1} parent=11 // pred_check
          %p268 = pneg %p152
        $region30: #{tpu_custom_call.1} parent=11 // pred_check_branch
          %270 = sbr.rel (%p268) target = $region32
        $region31: #{tpu_custom_call.1} parent=11 // pred_region
          _
        $region32: #{tpu_custom_call.1} parent=11 // pred_fallthru
          _
        // Predicated region
        $region33: #{tpu_custom_call.1} parent=11 // pred_check
          %p271 = pneg %p173
        $region34: #{tpu_custom_call.1} parent=11 // pred_check_branch
          %273 = sbr.rel (%p271) target = $region36
        $region35: #{tpu_custom_call.1} parent=11 // pred_region
          _
        $region36: #{tpu_custom_call.1} parent=11 // pred_fallthru
          _
        // Predicated region
        $region37: #{tpu_custom_call.1} parent=11 // pred_check
          %p274 = pneg %p194
        $region38: #{tpu_custom_call.1} parent=11 // pred_check_branch
          %276 = sbr.rel (%p274) target = $region40
        $region39: #{tpu_custom_call.1} parent=11 // pred_region
          _
        $region40: #{tpu_custom_call.1} parent=11 // pred_fallthru
          _
        // Predicated region
        $region41: #{tpu_custom_call.1} parent=11 // pred_check
          %p277 = pneg %p215
        $region42: #{tpu_custom_call.1} parent=11 // pred_check_branch
          %279 = sbr.rel (%p277) target = $region44
        $region43: #{tpu_custom_call.1} parent=11 // pred_region
          _
        $region44: #{tpu_custom_call.1} parent=11 // pred_fallthru
          _
      $region12: #{tpu_custom_call.1} parent=5 // pred_fallthru
        _
      %p280 = scmp.lt.s32.totalorder %s21, 2
      // Predicated region
      $region45: #{tpu_custom_call.1} parent=5 // pred_check
        %p281 = pneg %p280
      $region46: #{tpu_custom_call.1} parent=5 // pred_check_branch
        %283 = sbr.rel (%p281) target = $region48
      $region47: #{tpu_custom_call.1} parent=5 // pred_region
        // Predicated region
        $region49: #{tpu_custom_call.1} parent=47 // pred_check
          %p284 = pneg %p41
        $region50: #{tpu_custom_call.1} parent=47 // pred_check_branch
          %286 = sbr.rel (%p284) target = $region52
        $region51: #{tpu_custom_call.1} parent=47 // pred_region
          %s287 = sand.u32 %s31, 1
          %s288 = scalar_lea.sflag [#allocation4], %s287
          %s289 = sand.u32 %s31, 1
          %s290 = smul.addr %s289, 8
          %s291 = scalar_lea.vmem [#allocation3], %s290
          %s293 = ssub.s32 128, 128
          %294 = vsyncadd %s288, %s293
          %s295 = smul.addr %s21, 128
          %s296 = scalar_lea.hbm %s0, %s295
          %s298 = sshll.u32 %s291, 4
          %s299 = int_to_ptr.vmem [resolvable:$true] %s298
          %301 = dma.hbm_to_vmem [thread:$0]  %s296, 128, %s299, %s288
        $region52: #{tpu_custom_call.1} parent=47 // pred_fallthru
          _
      $region48: #{tpu_custom_call.1} parent=5 // pred_fallthru
        _
      %p302 = scmp.le.s32.totalorder 1, %s21
      %p303 = scmp.lt.s32.totalorder %s21, 3
      %p304 = pnand %p302, %p303
      %p305 = pneg %p304
      // Predicated region
      $region53: #{tpu_custom_call.1} parent=5 // pred_check
        _
      $region54: #{tpu_custom_call.1} parent=5 // pred_check_branch
        %307 = sbr.rel (%p304) target = $region56
      $region55: #{tpu_custom_call.1} parent=5 // pred_region
        %s308 = ssub.s32 %s21, 1
        %s309 = sand.u32 %s34, 1
        %s310 = scalar_lea.sflag [#allocation4], %s309
        %s311 = sand.u32 %s34, 1
        %s312 = smul.addr %s311, 8
        %s313 = scalar_lea.vmem [#allocation3], %s312
        // Predicated region
        $region57: #{tpu_custom_call.1} parent=55 // pred_check
          %p314 = pneg %p47
        $region58: #{tpu_custom_call.1} parent=55 // pred_check_branch
          %316 = sbr.rel (%p314) target = $region60
        $region59: #{tpu_custom_call.1} parent=55 // pred_region
          %317 = dma.done %s310, 128
        $region60: #{tpu_custom_call.1} parent=55 // pred_fallthru
          _
        %s318 = sand.u32 %s34, 1
        %s319 = scalar_lea.sflag [#allocation4], %s318
        %s320 = sand.u32 %s34, 1
        %s321 = smul.addr %s320, 8
        %s322 = scalar_lea.vmem [#allocation3], %s321
        %p323 = pneg %p47
        %p324 = pneg %p44
        %p325 = pneg %p68
        %p326 = pneg %p65
        %p327 = pneg %p89
        %p328 = pneg %p86
        %p329 = pneg %p110
        %p330 = pneg %p107
        %p331 = pneg %p131
        %p332 = pneg %p128
        %p333 = pneg %p152
        %p334 = pneg %p149
        %p335 = pneg %p173
        %p336 = pneg %p170
        %p337 = pneg %p194
        %p338 = pneg %p191
        %p339 = pneg %p215
        %p340 = pneg %p212
        %p341 = pneg %p241
        %p342 = pneg %p238
        %s343 = sand.u32 %s228, 1
        %s344 = scalar_lea.sflag [#allocation5], %s343
        %s345 = sand.u32 %s228, 1
        %s346 = smul.addr %s345, 8
        %s347 = scalar_lea.vmem [#allocation6], %s346
        %v348 = vld [vmem:[%s313] sm:$0xff]
        %v349 = vld [vmem:[%s1] sm:$0xff]
        %v350 = vld [vmem:[%s1 + $0x8] sm:$0xff]
        %v351 = vld [vmem:[%s1 + $0x10] sm:$0xff]
        %v352 = vld [vmem:[%s1 + $0x18] sm:$0xff]
        %vm353 = vcmask 261120
        %v355 = vsel %vm353, %v348, 0
        %357 = vmatprep.subr.mxu0 0.0
        %358 = vmatpush1.msra.mxu0 %v349
        %359 = vmatprep.subr.mxu0 0.0
        %360 = vmatpush1.msra.mxu0 %v350
        %361 = vmatprep.subr.mxu0 0.0
        %362 = vmatpush1.msra.mxu0 %v351
        %363 = vmatprep.subr.mxu0 0.0
        %364 = vmatpush1.msra.mxu0 %v352
        %365 = vmatprep.subr.mxu0 0.0
        %366 = vmatpush1.msra.mxu0 0.0
        %367 = vmatprep.subr.mxu0 0.0
        %368 = vmatpush1.msra.mxu0 0.0
        %369 = vmatprep.subr.mxu0 0.0
        %370 = vmatpush1.msra.mxu0 0.0
        %371 = vmatprep.subr.mxu0 0.0
        %372 = vmatpush1.msra.mxu0 0.0
        %373 = vmatprep.subr.mxu0 0.0
        %374 = vmatpush1.msra.mxu0 0.0
        %375 = vmatprep.subr.mxu0 0.0
        %376 = vmatpush1.msra.mxu0 0.0
        %377 = vmatprep.subr.mxu0 0.0
        %378 = vmatpush1.msra.mxu0 0.0
        %379 = vmatprep.subr.mxu0 0.0
        %380 = vmatpush1.msra.mxu0 0.0
        %381 = vmatprep.subr.mxu0 0.0
        %382 = vmatpush1.msra.mxu0 0.0
        %383 = vmatprep.subr.mxu0 0.0
        %384 = vmatpush1.msra.mxu0 0.0
        %385 = vmatprep.subr.mxu0 0.0
        %386 = vmatpush1.msra.mxu0 0.0
        %387 = vmatprep.subr.mxu0 0.0
        %388 = vmatpush1.msra.mxu0 0.0
        %389 = vmatprep.subr.mxu0 0.0
        %390 = vmatpush1.msra.mxu0 0.0
        %391 = vmatprep.subr.mxu0 0.0
        %392 = vmatpush1.msra.mxu0 0.0
        %393 = vmatprep.subr.mxu0 0.0
        %394 = vmatpush1.msra.mxu0 0.0
        %395 = vmatprep.subr.mxu0 0.0
        %396 = vmatpush1.msra.mxu0 0.0
        %397 = vmatprep.subr.mxu0 0.0
        %398 = vmatpush1.msra.mxu0 0.0
        %399 = vmatprep.subr.mxu0 0.0
        %400 = vmatpush1.msra.mxu0 0.0
        %401 = vmatprep.subr.mxu0 0.0
        %402 = vmatpush1.msra.mxu0 0.0
        %403 = vmatprep.subr.mxu0 0.0
        %404 = vmatpush1.msra.mxu0 0.0
        %405 = vmatprep.subr.mxu0 0.0
        %406 = vmatpush1.msra.mxu0 0.0
        %407 = vmatprep.subr.mxu0 0.0
        %408 = vmatpush1.msra.mxu0 0.0
        %409 = vmatprep.subr.mxu0 0.0
        %410 = vmatpush1.msra.mxu0 0.0
        %411 = vmatprep.subr.mxu0 0.0
        %412 = vmatpush1.msra.mxu0 0.0
        %413 = vmatprep.subr.mxu0 0.0
        %414 = vmatpush1.msra.mxu0 0.0
        %415 = vmatprep.subr.mxu0 0.0
        %416 = vmatpush1.msra.mxu0 0.0
        %417 = vmatprep.subr.mxu0 0.0
        %418 = vmatpush1.msra.mxu0 0.0
        %419 = vmatprep.subr.mxu0 0.0
        %420 = vmatpush1.msra.mxu0 0.0
        %421 = vmatprep.mubr.f32.mxu0 0.0
        %422 = vmatmul.mubr.f32.gmra.mrb[0].mxu0 %v355
        %v423 = vpop.f32.mrb[0].mxu0
        %v424 = vadd.f32 0.0, %v423
        %v425 = vpop.f32.mrb[0].mxu0
        %426 = vdwg.mxu0
        %428 = vrot.lane.b32.xlu0 %v424, 96
        %v429 = vpop.permute.xlu0 %428
        %vm430 = vcmask 64512
        %v431 = vsel %vm430, %v424, 0
        %v433 = vsel %vm430, %v429, 0
        %435 = vmatprep.subr.mxu0 0.0
        %436 = vmatpush1.xpose.msra.mxu0 %v433
        %437 = vmatprep.subr.mxu0 0.0
        %438 = vmatpush1.xpose.msra.mxu0 0.0
        %439 = vmatprep.subr.mxu0 0.0
        %440 = vmatpush1.xpose.msra.mxu0 0.0
        %441 = vmatprep.subr.mxu0 0.0
        %442 = vmatpush1.xpose.msra.mxu0 0.0
        %443 = vmatprep.subr.mxu0 0.0
        %444 = vmatpush1.xpose.msra.mxu0 0.0
        %445 = vmatprep.subr.mxu0 0.0
        %446 = vmatpush1.xpose.msra.mxu0 0.0
        %447 = vmatprep.subr.mxu0 0.0
        %448 = vmatpush1.xpose.msra.mxu0 0.0
        %449 = vmatprep.subr.mxu0 0.0
        %450 = vmatpush1.xpose.msra.mxu0 0.0
        %451 = vmatprep.subr.mxu0 0.0
        %452 = vmatpush1.xpose.msra.mxu0 0.0
        %453 = vmatprep.subr.mxu0 0.0
        %454 = vmatpush1.xpose.msra.mxu0 0.0
        %455 = vmatprep.subr.mxu0 0.0
        %456 = vmatpush1.xpose.msra.mxu0 0.0
        %457 = vmatprep.subr.mxu0 0.0
        %458 = vmatpush1.xpose.msra.mxu0 0.0
        %459 = vmatprep.subr.mxu0 0.0
        %460 = vmatpush1.xpose.msra.mxu0 0.0
        %461 = vmatprep.subr.mxu0 0.0
        %462 = vmatpush1.xpose.msra.mxu0 0.0
        %463 = vmatprep.subr.mxu0 0.0
        %464 = vmatpush1.xpose.msra.mxu0 0.0
        %465 = vmatprep.subr.mxu0 0.0
        %466 = vmatpush1.xpose.msra.mxu0 0.0
        %467 = vmatprep.subr.mxu0 0.0
        %468 = vmatpush1.xpose.msra.mxu0 0.0
        %469 = vmatprep.subr.mxu0 0.0
        %470 = vmatpush1.xpose.msra.mxu0 0.0
        %471 = vmatprep.subr.mxu0 0.0
        %472 = vmatpush1.xpose.msra.mxu0 0.0
        %473 = vmatprep.subr.mxu0 0.0
        %474 = vmatpush1.xpose.msra.mxu0 0.0
        %475 = vmatprep.subr.mxu0 0.0
        %476 = vmatpush1.xpose.msra.mxu0 0.0
        %477 = vmatprep.subr.mxu0 0.0
        %478 = vmatpush1.xpose.msra.mxu0 0.0
        %479 = vmatprep.subr.mxu0 0.0
        %480 = vmatpush1.xpose.msra.mxu0 0.0
        %481 = vmatprep.subr.mxu0 0.0
        %482 = vmatpush1.xpose.msra.mxu0 0.0
        %483 = vmatprep.subr.mxu0 0.0
        %484 = vmatpush1.xpose.msra.mxu0 0.0
        %485 = vmatprep.subr.mxu0 0.0
        %486 = vmatpush1.xpose.msra.mxu0 0.0
        %487 = vmatprep.subr.mxu0 0.0
        %488 = vmatpush1.xpose.msra.mxu0 0.0
        %489 = vmatprep.subr.mxu0 0.0
        %490 = vmatpush1.xpose.msra.mxu0 0.0
        %491 = vmatprep.subr.mxu0 0.0
        %492 = vmatpush1.xpose.msra.mxu0 0.0
        %493 = vmatprep.subr.mxu0 0.0
        %494 = vmatpush1.xpose.msra.mxu0 0.0
        %495 = vmatprep.subr.mxu0 0.0
        %496 = vmatpush1.xpose.msra.mxu0 0.0
        %497 = vmatprep.subr.mxu0 0.0
        %498 = vmatpush1.xpose.msra.mxu0 0.0
        %499 = vmatprep.mubr.f32.mxu0 0.0
        %500 = vmatmul.mubr.f32.gmra.mrb[0].mxu0 %v431
        %v501 = vpop.f32.mrb[0].mxu0
        %v502 = vadd.f32 0.0, %v501
        %v503 = vpop.f32.mrb[0].mxu0
        %504 = vdwg.mxu0
        %v505 = vmul.f32 %v502, 0.35355338
        %v506 = vsel %vm430, %v505, -inf
        %507 = vmax.xlane.f32.xlu0 %v506
        %v508 = vpop.xlane.xlu0 %507
        %v509 = vsub.f32 %v505, %v508
        %v510 = vmul.f32 %v509, 1.442695
        %v511 = vpow.pop %v510
        %v512 = vsel %vm430, %v511, 0.0
        %513 = vadd.xlane.f32.xlu0 %v512
        %v514 = vpop.xlane.xlu0 %513
        %v515 = vrcp.pop %v514
        %v516 = vmul.f32 %v511, %v515
        %517 = vrot.lane.b32.xlu0 %v424, 64
        %v518 = vpop.permute.xlu0 %517
        %v521 = vsel %vm430, %v516, 0
        %523 = vmatprep.subr.mxu0 0.0
        %524 = vmatpush1.msra.mxu0 %v518
        %525 = vmatprep.subr.mxu0 0.0
        %526 = vmatpush1.msra.mxu0 0.0
        %527 = vmatprep.subr.mxu0 0.0
        %528 = vmatpush1.msra.mxu0 0.0
        %529 = vmatprep.subr.mxu0 0.0
        %530 = vmatpush1.msra.mxu0 0.0
        %531 = vmatprep.subr.mxu0 0.0
        %532 = vmatpush1.msra.mxu0 0.0
        %533 = vmatprep.subr.mxu0 0.0
        %534 = vmatpush1.msra.mxu0 0.0
        %535 = vmatprep.subr.mxu0 0.0
        %536 = vmatpush1.msra.mxu0 0.0
        %537 = vmatprep.subr.mxu0 0.0
        %538 = vmatpush1.msra.mxu0 0.0
        %539 = vmatprep.subr.mxu0 0.0
        %540 = vmatpush1.msra.mxu0 0.0
        %541 = vmatprep.subr.mxu0 0.0
        %542 = vmatpush1.msra.mxu0 0.0
        %543 = vmatprep.subr.mxu0 0.0
        %544 = vmatpush1.msra.mxu0 0.0
        %545 = vmatprep.subr.mxu0 0.0
        %546 = vmatpush1.msra.mxu0 0.0
        %547 = vmatprep.subr.mxu0 0.0
        %548 = vmatpush1.msra.mxu0 0.0
        %549 = vmatprep.subr.mxu0 0.0
        %550 = vmatpush1.msra.mxu0 0.0
        %551 = vmatprep.subr.mxu0 0.0
        %552 = vmatpush1.msra.mxu0 0.0
        %553 = vmatprep.subr.mxu0 0.0
        %554 = vmatpush1.msra.mxu0 0.0
        %555 = vmatprep.subr.mxu0 0.0
        %556 = vmatpush1.msra.mxu0 0.0
        %557 = vmatprep.subr.mxu0 0.0
        %558 = vmatpush1.msra.mxu0 0.0
        %559 = vmatprep.subr.mxu0 0.0
        %560 = vmatpush1.msra.mxu0 0.0
        %561 = vmatprep.subr.mxu0 0.0
        %562 = vmatpush1.msra.mxu0 0.0
        %563 = vmatprep.subr.mxu0 0.0
        %564 = vmatpush1.msra.mxu0 0.0
        %565 = vmatprep.subr.mxu0 0.0
        %566 = vmatpush1.msra.mxu0 0.0
        %567 = vmatprep.subr.mxu0 0.0
        %568 = vmatpush1.msra.mxu0 0.0
        %569 = vmatprep.subr.mxu0 0.0
        %570 = vmatpush1.msra.mxu0 0.0
        %571 = vmatprep.subr.mxu0 0.0
        %572 = vmatpush1.msra.mxu0 0.0
        %573 = vmatprep.subr.mxu0 0.0
        %574 = vmatpush1.msra.mxu0 0.0
        %575 = vmatprep.subr.mxu0 0.0
        %576 = vmatpush1.msra.mxu0 0.0
        %577 = vmatprep.subr.mxu0 0.0
        %578 = vmatpush1.msra.mxu0 0.0
        %579 = vmatprep.subr.mxu0 0.0
        %580 = vmatpush1.msra.mxu0 0.0
        %581 = vmatprep.subr.mxu0 0.0
        %582 = vmatpush1.msra.mxu0 0.0
        %583 = vmatprep.subr.mxu0 0.0
        %584 = vmatpush1.msra.mxu0 0.0
        %585 = vmatprep.subr.mxu0 0.0
        %586 = vmatpush1.msra.mxu0 0.0
        %587 = vmatprep.mubr.f32.mxu0 0.0
        %588 = vmatmul.mubr.f32.gmra.mrb[0].mxu0 %v521
        %v589 = vpop.f32.mrb[0].mxu0
        %v590 = vadd.f32 0.0, %v589
        %v591 = vpop.f32.mrb[0].mxu0
        %592 = vdwg.mxu0
        %593 = vst.msk [vmem:[#allocation2] sm:$0xff] %vm430, %v590
        %594 = vrot.lane.b32.xlu0 %v424, 120
        %v595 = vpop.permute.xlu0 %594
        %596 = vrot.lane.b32.xlu0 %v424, 88
        %v597 = vpop.permute.xlu0 %596
        %v598 = vsel %vm430, %v595, 0
        %v600 = vsel %vm430, %v597, 0
        %602 = vmatprep.subr.mxu0 0.0
        %603 = vmatpush1.xpose.msra.mxu0 %v600
        %604 = vmatprep.subr.mxu0 0.0
        %605 = vmatpush1.xpose.msra.mxu0 0.0
        %606 = vmatprep.subr.mxu0 0.0
        %607 = vmatpush1.xpose.msra.mxu0 0.0
        %608 = vmatprep.subr.mxu0 0.0
        %609 = vmatpush1.xpose.msra.mxu0 0.0
        %610 = vmatprep.subr.mxu0 0.0
        %611 = vmatpush1.xpose.msra.mxu0 0.0
        %612 = vmatprep.subr.mxu0 0.0
        %613 = vmatpush1.xpose.msra.mxu0 0.0
        %614 = vmatprep.subr.mxu0 0.0
        %615 = vmatpush1.xpose.msra.mxu0 0.0
        %616 = vmatprep.subr.mxu0 0.0
        %617 = vmatpush1.xpose.msra.mxu0 0.0
        %618 = vmatprep.subr.mxu0 0.0
        %619 = vmatpush1.xpose.msra.mxu0 0.0
        %620 = vmatprep.subr.mxu0 0.0
        %621 = vmatpush1.xpose.msra.mxu0 0.0
        %622 = vmatprep.subr.mxu0 0.0
        %623 = vmatpush1.xpose.msra.mxu0 0.0
        %624 = vmatprep.subr.mxu0 0.0
        %625 = vmatpush1.xpose.msra.mxu0 0.0
        %626 = vmatprep.subr.mxu0 0.0
        %627 = vmatpush1.xpose.msra.mxu0 0.0
        %628 = vmatprep.subr.mxu0 0.0
        %629 = vmatpush1.xpose.msra.mxu0 0.0
        %630 = vmatprep.subr.mxu0 0.0
        %631 = vmatpush1.xpose.msra.mxu0 0.0
        %632 = vmatprep.subr.mxu0 0.0
        %633 = vmatpush1.xpose.msra.mxu0 0.0
        %634 = vmatprep.subr.mxu0 0.0
        %635 = vmatpush1.xpose.msra.mxu0 0.0
        %636 = vmatprep.subr.mxu0 0.0
        %637 = vmatpush1.xpose.msra.mxu0 0.0
        %638 = vmatprep.subr.mxu0 0.0
        %639 = vmatpush1.xpose.msra.mxu0 0.0
        %640 = vmatprep.subr.mxu0 0.0
        %641 = vmatpush1.xpose.msra.mxu0 0.0
        %642 = vmatprep.subr.mxu0 0.0
        %643 = vmatpush1.xpose.msra.mxu0 0.0
        %644 = vmatprep.subr.mxu0 0.0
        %645 = vmatpush1.xpose.msra.mxu0 0.0
        %646 = vmatprep.subr.mxu0 0.0
        %647 = vmatpush1.xpose.msra.mxu0 0.0
        %648 = vmatprep.subr.mxu0 0.0
        %649 = vmatpush1.xpose.msra.mxu0 0.0
        %650 = vmatprep.subr.mxu0 0.0
        %651 = vmatpush1.xpose.msra.mxu0 0.0
        %652 = vmatprep.subr.mxu0 0.0
        %653 = vmatpush1.xpose.msra.mxu0 0.0
        %654 = vmatprep.subr.mxu0 0.0
        %655 = vmatpush1.xpose.msra.mxu0 0.0
        %656 = vmatprep.subr.mxu0 0.0
        %657 = vmatpush1.xpose.msra.mxu0 0.0
        %658 = vmatprep.subr.mxu0 0.0
        %659 = vmatpush1.xpose.msra.mxu0 0.0
        %660 = vmatprep.subr.mxu0 0.0
        %661 = vmatpush1.xpose.msra.mxu0 0.0
        %662 = vmatprep.subr.mxu0 0.0
        %663 = vmatpush1.xpose.msra.mxu0 0.0
        %664 = vmatprep.subr.mxu0 0.0
        %665 = vmatpush1.xpose.msra.mxu0 0.0
        %666 = vmatprep.mubr.f32.mxu0 0.0
        %667 = vmatmul.mubr.f32.gmra.mrb[0].mxu0 %v598
        %v668 = vpop.f32.mrb[0].mxu0
        %v669 = vadd.f32 0.0, %v668
        %v670 = vpop.f32.mrb[0].mxu0
        %671 = vdwg.mxu0
        %v672 = vmul.f32 %v669, 0.35355338
        %v673 = vsel %vm430, %v672, -inf
        %674 = vmax.xlane.f32.xlu0 %v673
        %v675 = vpop.xlane.xlu0 %674
        %v676 = vsub.f32 %v672, %v675
        %v677 = vmul.f32 %v676, 1.442695
        %v678 = vpow.pop %v677
        %v679 = vsel %vm430, %v678, 0.0
        %680 = vadd.xlane.f32.xlu0 %v679
        %v681 = vpop.xlane.xlu0 %680
        %v682 = vrcp.pop %v681
        %v683 = vmul.f32 %v678, %v682
        %684 = vrot.lane.b32.xlu0 %v424, 56
        %v685 = vpop.permute.xlu0 %684
        %v688 = vsel %vm430, %v683, 0
        %690 = vmatprep.subr.mxu0 0.0
        %691 = vmatpush1.msra.mxu0 %v685
        %692 = vmatprep.subr.mxu0 0.0
        %693 = vmatpush1.msra.mxu0 0.0
        %694 = vmatprep.subr.mxu0 0.0
        %695 = vmatpush1.msra.mxu0 0.0
        %696 = vmatprep.subr.mxu0 0.0
        %697 = vmatpush1.msra.mxu0 0.0
        %698 = vmatprep.subr.mxu0 0.0
        %699 = vmatpush1.msra.mxu0 0.0
        %700 = vmatprep.subr.mxu0 0.0
        %701 = vmatpush1.msra.mxu0 0.0
        %702 = vmatprep.subr.mxu0 0.0
        %703 = vmatpush1.msra.mxu0 0.0
        %704 = vmatprep.subr.mxu0 0.0
        %705 = vmatpush1.msra.mxu0 0.0
        %706 = vmatprep.subr.mxu0 0.0
        %707 = vmatpush1.msra.mxu0 0.0
        %708 = vmatprep.subr.mxu0 0.0
        %709 = vmatpush1.msra.mxu0 0.0
        %710 = vmatprep.subr.mxu0 0.0
        %711 = vmatpush1.msra.mxu0 0.0
        %712 = vmatprep.subr.mxu0 0.0
        %713 = vmatpush1.msra.mxu0 0.0
        %714 = vmatprep.subr.mxu0 0.0
        %715 = vmatpush1.msra.mxu0 0.0
        %716 = vmatprep.subr.mxu0 0.0
        %717 = vmatpush1.msra.mxu0 0.0
        %718 = vmatprep.subr.mxu0 0.0
        %719 = vmatpush1.msra.mxu0 0.0
        %720 = vmatprep.subr.mxu0 0.0
        %721 = vmatpush1.msra.mxu0 0.0
        %722 = vmatprep.subr.mxu0 0.0
        %723 = vmatpush1.msra.mxu0 0.0
        %724 = vmatprep.subr.mxu0 0.0
        %725 = vmatpush1.msra.mxu0 0.0
        %726 = vmatprep.subr.mxu0 0.0
        %727 = vmatpush1.msra.mxu0 0.0
        %728 = vmatprep.subr.mxu0 0.0
        %729 = vmatpush1.msra.mxu0 0.0
        %730 = vmatprep.subr.mxu0 0.0
        %731 = vmatpush1.msra.mxu0 0.0
        %732 = vmatprep.subr.mxu0 0.0
        %733 = vmatpush1.msra.mxu0 0.0
        %734 = vmatprep.subr.mxu0 0.0
        %735 = vmatpush1.msra.mxu0 0.0
        %736 = vmatprep.subr.mxu0 0.0
        %737 = vmatpush1.msra.mxu0 0.0
        %738 = vmatprep.subr.mxu0 0.0
        %739 = vmatpush1.msra.mxu0 0.0
        %740 = vmatprep.subr.mxu0 0.0
        %741 = vmatpush1.msra.mxu0 0.0
        %742 = vmatprep.subr.mxu0 0.0
        %743 = vmatpush1.msra.mxu0 0.0
        %744 = vmatprep.subr.mxu0 0.0
        %745 = vmatpush1.msra.mxu0 0.0
        %746 = vmatprep.subr.mxu0 0.0
        %747 = vmatpush1.msra.mxu0 0.0
        %748 = vmatprep.subr.mxu0 0.0
        %749 = vmatpush1.msra.mxu0 0.0
        %750 = vmatprep.subr.mxu0 0.0
        %751 = vmatpush1.msra.mxu0 0.0
        %752 = vmatprep.subr.mxu0 0.0
        %753 = vmatpush1.msra.mxu0 0.0
        %754 = vmatprep.mubr.f32.mxu0 0.0
        %755 = vmatmul.mubr.f32.gmra.mrb[0].mxu0 %v688
        %v756 = vpop.f32.mrb[0].mxu0
        %v757 = vadd.f32 0.0, %v756
        %v758 = vpop.f32.mrb[0].mxu0
        %759 = vdwg.mxu0
        %761 = vrot.lane.b32.xlu0 %v757, 8
        %v762 = vpop.permute.xlu0 %761
        %vm764 = vcmask 130112
        %765 = vst.msk [vmem:[#allocation2] sm:$0xff] %vm764, %v762
        %766 = vrot.lane.b32.xlu0 %v424, 112
        %v767 = vpop.permute.xlu0 %766
        %768 = vrot.lane.b32.xlu0 %v424, 80
        %v769 = vpop.permute.xlu0 %768
        %v770 = vsel %vm430, %v767, 0
        %v772 = vsel %vm430, %v769, 0
        %774 = vmatprep.subr.mxu0 0.0
        %775 = vmatpush1.xpose.msra.mxu0 %v772
        %776 = vmatprep.subr.mxu0 0.0
        %777 = vmatpush1.xpose.msra.mxu0 0.0
        %778 = vmatprep.subr.mxu0 0.0
        %779 = vmatpush1.xpose.msra.mxu0 0.0
        %780 = vmatprep.subr.mxu0 0.0
        %781 = vmatpush1.xpose.msra.mxu0 0.0
        %782 = vmatprep.subr.mxu0 0.0
        %783 = vmatpush1.xpose.msra.mxu0 0.0
        %784 = vmatprep.subr.mxu0 0.0
        %785 = vmatpush1.xpose.msra.mxu0 0.0
        %786 = vmatprep.subr.mxu0 0.0
        %787 = vmatpush1.xpose.msra.mxu0 0.0
        %788 = vmatprep.subr.mxu0 0.0
        %789 = vmatpush1.xpose.msra.mxu0 0.0
        %790 = vmatprep.subr.mxu0 0.0
        %791 = vmatpush1.xpose.msra.mxu0 0.0
        %792 = vmatprep.subr.mxu0 0.0
        %793 = vmatpush1.xpose.msra.mxu0 0.0
        %794 = vmatprep.subr.mxu0 0.0
        %795 = vmatpush1.xpose.msra.mxu0 0.0
        %796 = vmatprep.subr.mxu0 0.0
        %797 = vmatpush1.xpose.msra.mxu0 0.0
        %798 = vmatprep.subr.mxu0 0.0
        %799 = vmatpush1.xpose.msra.mxu0 0.0
        %800 = vmatprep.subr.mxu0 0.0
        %801 = vmatpush1.xpose.msra.mxu0 0.0
        %802 = vmatprep.subr.mxu0 0.0
        %803 = vmatpush1.xpose.msra.mxu0 0.0
        %804 = vmatprep.subr.mxu0 0.0
        %805 = vmatpush1.xpose.msra.mxu0 0.0
        %806 = vmatprep.subr.mxu0 0.0
        %807 = vmatpush1.xpose.msra.mxu0 0.0
        %808 = vmatprep.subr.mxu0 0.0
        %809 = vmatpush1.xpose.msra.mxu0 0.0
        %810 = vmatprep.subr.mxu0 0.0
        %811 = vmatpush1.xpose.msra.mxu0 0.0
        %812 = vmatprep.subr.mxu0 0.0
        %813 = vmatpush1.xpose.msra.mxu0 0.0
        %814 = vmatprep.subr.mxu0 0.0
        %815 = vmatpush1.xpose.msra.mxu0 0.0
        %816 = vmatprep.subr.mxu0 0.0
        %817 = vmatpush1.xpose.msra.mxu0 0.0
        %818 = vmatprep.subr.mxu0 0.0
        %819 = vmatpush1.xpose.msra.mxu0 0.0
        %820 = vmatprep.subr.mxu0 0.0
        %821 = vmatpush1.xpose.msra.mxu0 0.0
        %822 = vmatprep.subr.mxu0 0.0
        %823 = vmatpush1.xpose.msra.mxu0 0.0
        %824 = vmatprep.subr.mxu0 0.0
        %825 = vmatpush1.xpose.msra.mxu0 0.0
        %826 = vmatprep.subr.mxu0 0.0
        %827 = vmatpush1.xpose.msra.mxu0 0.0
        %828 = vmatprep.subr.mxu0 0.0
        %829 = vmatpush1.xpose.msra.mxu0 0.0
        %830 = vmatprep.subr.mxu0 0.0
        %831 = vmatpush1.xpose.msra.mxu0 0.0
        %832 = vmatprep.subr.mxu0 0.0
        %833 = vmatpush1.xpose.msra.mxu0 0.0
        %834 = vmatprep.subr.mxu0 0.0
        %835 = vmatpush1.xpose.msra.mxu0 0.0
        %836 = vmatprep.subr.mxu0 0.0
        %837 = vmatpush1.xpose.msra.mxu0 0.0
        %838 = vmatprep.mubr.f32.mxu0 0.0
        %839 = vmatmul.mubr.f32.gmra.mrb[0].mxu0 %v770
        %v840 = vpop.f32.mrb[0].mxu0
        %v841 = vadd.f32 0.0, %v840
        %v842 = vpop.f32.mrb[0].mxu0
        %843 = vdwg.mxu0
        %v844 = vmul.f32 %v841, 0.35355338
        %v845 = vsel %vm430, %v844, -inf
        %846 = vmax.xlane.f32.xlu0 %v845
        %v847 = vpop.xlane.xlu0 %846
        %v848 = vsub.f32 %v844, %v847
        %v849 = vmul.f32 %v848, 1.442695
        %v850 = vpow.pop %v849
        %v851 = vsel %vm430, %v850, 0.0
        %852 = vadd.xlane.f32.xlu0 %v851
        %v853 = vpop.xlane.xlu0 %852
        %v854 = vrcp.pop %v853
        %v855 = vmul.f32 %v850, %v854
        %856 = vrot.lane.b32.xlu0 %v424, 48
        %v857 = vpop.permute.xlu0 %856
        %v860 = vsel %vm430, %v855, 0
        %862 = vmatprep.subr.mxu0 0.0
        %863 = vmatpush1.msra.mxu0 %v857
        %864 = vmatprep.subr.mxu0 0.0
        %865 = vmatpush1.msra.mxu0 0.0
        %866 = vmatprep.subr.mxu0 0.0
        %867 = vmatpush1.msra.mxu0 0.0
        %868 = vmatprep.subr.mxu0 0.0
        %869 = vmatpush1.msra.mxu0 0.0
        %870 = vmatprep.subr.mxu0 0.0
        %871 = vmatpush1.msra.mxu0 0.0
        %872 = vmatprep.subr.mxu0 0.0
        %873 = vmatpush1.msra.mxu0 0.0
        %874 = vmatprep.subr.mxu0 0.0
        %875 = vmatpush1.msra.mxu0 0.0
        %876 = vmatprep.subr.mxu0 0.0
        %877 = vmatpush1.msra.mxu0 0.0
        %878 = vmatprep.subr.mxu0 0.0
        %879 = vmatpush1.msra.mxu0 0.0
        %880 = vmatprep.subr.mxu0 0.0
        %881 = vmatpush1.msra.mxu0 0.0
        %882 = vmatprep.subr.mxu0 0.0
        %883 = vmatpush1.msra.mxu0 0.0
        %884 = vmatprep.subr.mxu0 0.0
        %885 = vmatpush1.msra.mxu0 0.0
        %886 = vmatprep.subr.mxu0 0.0
        %887 = vmatpush1.msra.mxu0 0.0
        %888 = vmatprep.subr.mxu0 0.0
        %889 = vmatpush1.msra.mxu0 0.0
        %890 = vmatprep.subr.mxu0 0.0
        %891 = vmatpush1.msra.mxu0 0.0
        %892 = vmatprep.subr.mxu0 0.0
        %893 = vmatpush1.msra.mxu0 0.0
        %894 = vmatprep.subr.mxu0 0.0
        %895 = vmatpush1.msra.mxu0 0.0
        %896 = vmatprep.subr.mxu0 0.0
        %897 = vmatpush1.msra.mxu0 0.0
        %898 = vmatprep.subr.mxu0 0.0
        %899 = vmatpush1.msra.mxu0 0.0
        %900 = vmatprep.subr.mxu0 0.0
        %901 = vmatpush1.msra.mxu0 0.0
        %902 = vmatprep.subr.mxu0 0.0
        %903 = vmatpush1.msra.mxu0 0.0
        %904 = vmatprep.subr.mxu0 0.0
        %905 = vmatpush1.msra.mxu0 0.0
        %906 = vmatprep.subr.mxu0 0.0
        %907 = vmatpush1.msra.mxu0 0.0
        %908 = vmatprep.subr.mxu0 0.0
        %909 = vmatpush1.msra.mxu0 0.0
        %910 = vmatprep.subr.mxu0 0.0
        %911 = vmatpush1.msra.mxu0 0.0
        %912 = vmatprep.subr.mxu0 0.0
        %913 = vmatpush1.msra.mxu0 0.0
        %914 = vmatprep.subr.mxu0 0.0
        %915 = vmatpush1.msra.mxu0 0.0
        %916 = vmatprep.subr.mxu0 0.0
        %917 = vmatpush1.msra.mxu0 0.0
        %918 = vmatprep.subr.mxu0 0.0
        %919 = vmatpush1.msra.mxu0 0.0
        %920 = vmatprep.subr.mxu0 0.0
        %921 = vmatpush1.msra.mxu0 0.0
        %922 = vmatprep.subr.mxu0 0.0
        %923 = vmatpush1.msra.mxu0 0.0
        %924 = vmatprep.subr.mxu0 0.0
        %925 = vmatpush1.msra.mxu0 0.0
        %926 = vmatprep.mubr.f32.mxu0 0.0
        %927 = vmatmul.mubr.f32.gmra.mrb[0].mxu0 %v860
        %v928 = vpop.f32.mrb[0].mxu0
        %v929 = vadd.f32 0.0, %v928
        %v930 = vpop.f32.mrb[0].mxu0
        %931 = vdwg.mxu0
        %933 = vrot.lane.b32.xlu0 %v929, 16
        %v934 = vpop.permute.xlu0 %933
        %vm936 = vcmask 195712
        %937 = vst.msk [vmem:[#allocation2] sm:$0xff] %vm936, %v934
        %938 = vrot.lane.b32.xlu0 %v424, 104
        %v939 = vpop.permute.xlu0 %938
        %940 = vrot.lane.b32.xlu0 %v424, 72
        %v941 = vpop.permute.xlu0 %940
        %v942 = vsel %vm430, %v939, 0
        %v944 = vsel %vm430, %v941, 0
        %946 = vmatprep.subr.mxu0 0.0
        %947 = vmatpush1.xpose.msra.mxu0 %v944
        %948 = vmatprep.subr.mxu0 0.0
        %949 = vmatpush1.xpose.msra.mxu0 0.0
        %950 = vmatprep.subr.mxu0 0.0
        %951 = vmatpush1.xpose.msra.mxu0 0.0
        %952 = vmatprep.subr.mxu0 0.0
        %953 = vmatpush1.xpose.msra.mxu0 0.0
        %954 = vmatprep.subr.mxu0 0.0
        %955 = vmatpush1.xpose.msra.mxu0 0.0
        %956 = vmatprep.subr.mxu0 0.0
        %957 = vmatpush1.xpose.msra.mxu0 0.0
        %958 = vmatprep.subr.mxu0 0.0
        %959 = vmatpush1.xpose.msra.mxu0 0.0
        %960 = vmatprep.subr.mxu0 0.0
        %961 = vmatpush1.xpose.msra.mxu0 0.0
        %962 = vmatprep.subr.mxu0 0.0
        %963 = vmatpush1.xpose.msra.mxu0 0.0
        %964 = vmatprep.subr.mxu0 0.0
        %965 = vmatpush1.xpose.msra.mxu0 0.0
        %966 = vmatprep.subr.mxu0 0.0
        %967 = vmatpush1.xpose.msra.mxu0 0.0
        %968 = vmatprep.subr.mxu0 0.0
        %969 = vmatpush1.xpose.msra.mxu0 0.0
        %970 = vmatprep.subr.mxu0 0.0
        %971 = vmatpush1.xpose.msra.mxu0 0.0
        %972 = vmatprep.subr.mxu0 0.0
        %973 = vmatpush1.xpose.msra.mxu0 0.0
        %974 = vmatprep.subr.mxu0 0.0
        %975 = vmatpush1.xpose.msra.mxu0 0.0
        %976 = vmatprep.subr.mxu0 0.0
        %977 = vmatpush1.xpose.msra.mxu0 0.0
        %978 = vmatprep.subr.mxu0 0.0
        %979 = vmatpush1.xpose.msra.mxu0 0.0
        %980 = vmatprep.subr.mxu0 0.0
        %981 = vmatpush1.xpose.msra.mxu0 0.0
        %982 = vmatprep.subr.mxu0 0.0
        %983 = vmatpush1.xpose.msra.mxu0 0.0
        %984 = vmatprep.subr.mxu0 0.0
        %985 = vmatpush1.xpose.msra.mxu0 0.0
        %986 = vmatprep.subr.mxu0 0.0
        %987 = vmatpush1.xpose.msra.mxu0 0.0
        %988 = vmatprep.subr.mxu0 0.0
        %989 = vmatpush1.xpose.msra.mxu0 0.0
        %990 = vmatprep.subr.mxu0 0.0
        %991 = vmatpush1.xpose.msra.mxu0 0.0
        %992 = vmatprep.subr.mxu0 0.0
        %993 = vmatpush1.xpose.msra.mxu0 0.0
        %994 = vmatprep.subr.mxu0 0.0
        %995 = vmatpush1.xpose.msra.mxu0 0.0
        %996 = vmatprep.subr.mxu0 0.0
        %997 = vmatpush1.xpose.msra.mxu0 0.0
        %998 = vmatprep.subr.mxu0 0.0
        %999 = vmatpush1.xpose.msra.mxu0 0.0
        %1000 = vmatprep.subr.mxu0 0.0
        %1001 = vmatpush1.xpose.msra.mxu0 0.0
        %1002 = vmatprep.subr.mxu0 0.0
        %1003 = vmatpush1.xpose.msra.mxu0 0.0
        %1004 = vmatprep.subr.mxu0 0.0
        %1005 = vmatpush1.xpose.msra.mxu0 0.0
        %1006 = vmatprep.subr.mxu0 0.0
        %1007 = vmatpush1.xpose.msra.mxu0 0.0
        %1008 = vmatprep.subr.mxu0 0.0
        %1009 = vmatpush1.xpose.msra.mxu0 0.0
        %1010 = vmatprep.mubr.f32.mxu0 0.0
        %1011 = vmatmul.mubr.f32.gmra.mrb[0].mxu0 %v942
        %v1012 = vpop.f32.mrb[0].mxu0
        %v1013 = vadd.f32 0.0, %v1012
        %v1014 = vpop.f32.mrb[0].mxu0
        %1015 = vdwg.mxu0
        %v1016 = vmul.f32 %v1013, 0.35355338
        %v1017 = vsel %vm430, %v1016, -inf
        %1018 = vmax.xlane.f32.xlu0 %v1017
        %v1019 = vpop.xlane.xlu0 %1018
        %v1020 = vsub.f32 %v1016, %v1019
        %v1021 = vmul.f32 %v1020, 1.442695
        %v1022 = vpow.pop %v1021
        %v1023 = vsel %vm430, %v1022, 0.0
        %1024 = vadd.xlane.f32.xlu0 %v1023
        %v1025 = vpop.xlane.xlu0 %1024
        %v1026 = vrcp.pop %v1025
        %v1027 = vmul.f32 %v1022, %v1026
        %1028 = vrot.lane.b32.xlu0 %v424, 40
        %v1029 = vpop.permute.xlu0 %1028
        %v1032 = vsel %vm430, %v1027, 0
        %1034 = vmatprep.subr.mxu0 0.0
        %1035 = vmatpush1.msra.mxu0 %v1029
        %1036 = vmatprep.subr.mxu0 0.0
        %1037 = vmatpush1.msra.mxu0 0.0
        %1038 = vmatprep.subr.mxu0 0.0
        %1039 = vmatpush1.msra.mxu0 0.0
        %1040 = vmatprep.subr.mxu0 0.0
        %1041 = vmatpush1.msra.mxu0 0.0
        %1042 = vmatprep.subr.mxu0 0.0
        %1043 = vmatpush1.msra.mxu0 0.0
        %1044 = vmatprep.subr.mxu0 0.0
        %1045 = vmatpush1.msra.mxu0 0.0
        %1046 = vmatprep.subr.mxu0 0.0
        %1047 = vmatpush1.msra.mxu0 0.0
        %1048 = vmatprep.subr.mxu0 0.0
        %1049 = vmatpush1.msra.mxu0 0.0
        %1050 = vmatprep.subr.mxu0 0.0
        %1051 = vmatpush1.msra.mxu0 0.0
        %1052 = vmatprep.subr.mxu0 0.0
        %1053 = vmatpush1.msra.mxu0 0.0
        %1054 = vmatprep.subr.mxu0 0.0
        %1055 = vmatpush1.msra.mxu0 0.0
        %1056 = vmatprep.subr.mxu0 0.0
        %1057 = vmatpush1.msra.mxu0 0.0
        %1058 = vmatprep.subr.mxu0 0.0
        %1059 = vmatpush1.msra.mxu0 0.0
        %1060 = vmatprep.subr.mxu0 0.0
        %1061 = vmatpush1.msra.mxu0 0.0
        %1062 = vmatprep.subr.mxu0 0.0
        %1063 = vmatpush1.msra.mxu0 0.0
        %1064 = vmatprep.subr.mxu0 0.0
        %1065 = vmatpush1.msra.mxu0 0.0
        %1066 = vmatprep.subr.mxu0 0.0
        %1067 = vmatpush1.msra.mxu0 0.0
        %1068 = vmatprep.subr.mxu0 0.0
        %1069 = vmatpush1.msra.mxu0 0.0
        %1070 = vmatprep.subr.mxu0 0.0
        %1071 = vmatpush1.msra.mxu0 0.0
        %1072 = vmatprep.subr.mxu0 0.0
        %1073 = vmatpush1.msra.mxu0 0.0
        %1074 = vmatprep.subr.mxu0 0.0
        %1075 = vmatpush1.msra.mxu0 0.0
        %1076 = vmatprep.subr.mxu0 0.0
        %1077 = vmatpush1.msra.mxu0 0.0
        %1078 = vmatprep.subr.mxu0 0.0
        %1079 = vmatpush1.msra.mxu0 0.0
        %1080 = vmatprep.subr.mxu0 0.0
        %1081 = vmatpush1.msra.mxu0 0.0
        %1082 = vmatprep.subr.mxu0 0.0
        %1083 = vmatpush1.msra.mxu0 0.0
        %1084 = vmatprep.subr.mxu0 0.0
        %1085 = vmatpush1.msra.mxu0 0.0
        %1086 = vmatprep.subr.mxu0 0.0
        %1087 = vmatpush1.msra.mxu0 0.0
        %1088 = vmatprep.subr.mxu0 0.0
        %1089 = vmatpush1.msra.mxu0 0.0
        %1090 = vmatprep.subr.mxu0 0.0
        %1091 = vmatpush1.msra.mxu0 0.0
        %1092 = vmatprep.subr.mxu0 0.0
        %1093 = vmatpush1.msra.mxu0 0.0
        %1094 = vmatprep.subr.mxu0 0.0
        %1095 = vmatpush1.msra.mxu0 0.0
        %1096 = vmatprep.subr.mxu0 0.0
        %1097 = vmatpush1.msra.mxu0 0.0
        %1098 = vmatprep.mubr.f32.mxu0 0.0
        %1099 = vmatmul.mubr.f32.gmra.mrb[0].mxu0 %v1032
        %v1100 = vpop.f32.mrb[0].mxu0
        %v1101 = vadd.f32 0.0, %v1100
        %v1102 = vpop.f32.mrb[0].mxu0
        %1103 = vdwg.mxu0
        %1105 = vrot.lane.b32.xlu0 %v1101, 24
        %v1106 = vpop.permute.xlu0 %1105
        %vm1108 = vcmask 261312
        %1109 = vst.msk [vmem:[#allocation2] sm:$0xff] %vm1108, %v1106
        %v1110 = vld [vmem:[#allocation2] sm:$0xff]
        %v1111 = vld [vmem:[%s2] sm:$0xff]
        %v1112 = vld [vmem:[%s2 + $0x8] sm:$0xff]
        %v1113 = vld [vmem:[%s2 + $0x10] sm:$0xff]
        %v1114 = vld [vmem:[%s2 + $0x18] sm:$0xff]
        %v1116 = vsel %vm353, %v1110, 0
        %1118 = vmatprep.subr.mxu0 0.0
        %1119 = vmatpush1.msra.mxu0 %v1111
        %1120 = vmatprep.subr.mxu0 0.0
        %1121 = vmatpush1.msra.mxu0 %v1112
        %1122 = vmatprep.subr.mxu0 0.0
        %1123 = vmatpush1.msra.mxu0 %v1113
        %1124 = vmatprep.subr.mxu0 0.0
        %1125 = vmatpush1.msra.mxu0 %v1114
        %1126 = vmatprep.subr.mxu0 0.0
        %1127 = vmatpush1.msra.mxu0 0.0
        %1128 = vmatprep.subr.mxu0 0.0
        %1129 = vmatpush1.msra.mxu0 0.0
        %1130 = vmatprep.subr.mxu0 0.0
        %1131 = vmatpush1.msra.mxu0 0.0
        %1132 = vmatprep.subr.mxu0 0.0
        %1133 = vmatpush1.msra.mxu0 0.0
        %1134 = vmatprep.subr.mxu0 0.0
        %1135 = vmatpush1.msra.mxu0 0.0
        %1136 = vmatprep.subr.mxu0 0.0
        %1137 = vmatpush1.msra.mxu0 0.0
        %1138 = vmatprep.subr.mxu0 0.0
        %1139 = vmatpush1.msra.mxu0 0.0
        %1140 = vmatprep.subr.mxu0 0.0
        %1141 = vmatpush1.msra.mxu0 0.0
        %1142 = vmatprep.subr.mxu0 0.0
        %1143 = vmatpush1.msra.mxu0 0.0
        %1144 = vmatprep.subr.mxu0 0.0
        %1145 = vmatpush1.msra.mxu0 0.0
        %1146 = vmatprep.subr.mxu0 0.0
        %1147 = vmatpush1.msra.mxu0 0.0
        %1148 = vmatprep.subr.mxu0 0.0
        %1149 = vmatpush1.msra.mxu0 0.0
        %1150 = vmatprep.subr.mxu0 0.0
        %1151 = vmatpush1.msra.mxu0 0.0
        %1152 = vmatprep.subr.mxu0 0.0
        %1153 = vmatpush1.msra.mxu0 0.0
        %1154 = vmatprep.subr.mxu0 0.0
        %1155 = vmatpush1.msra.mxu0 0.0
        %1156 = vmatprep.subr.mxu0 0.0
        %1157 = vmatpush1.msra.mxu0 0.0
        %1158 = vmatprep.subr.mxu0 0.0
        %1159 = vmatpush1.msra.mxu0 0.0
        %1160 = vmatprep.subr.mxu0 0.0
        %1161 = vmatpush1.msra.mxu0 0.0
        %1162 = vmatprep.subr.mxu0 0.0
        %1163 = vmatpush1.msra.mxu0 0.0
        %1164 = vmatprep.subr.mxu0 0.0
        %1165 = vmatpush1.msra.mxu0 0.0
        %1166 = vmatprep.subr.mxu0 0.0
        %1167 = vmatpush1.msra.mxu0 0.0
        %1168 = vmatprep.subr.mxu0 0.0
        %1169 = vmatpush1.msra.mxu0 0.0
        %1170 = vmatprep.subr.mxu0 0.0
        %1171 = vmatpush1.msra.mxu0 0.0
        %1172 = vmatprep.subr.mxu0 0.0
        %1173 = vmatpush1.msra.mxu0 0.0
        %1174 = vmatprep.subr.mxu0 0.0
        %1175 = vmatpush1.msra.mxu0 0.0
        %1176 = vmatprep.subr.mxu0 0.0
        %1177 = vmatpush1.msra.mxu0 0.0
        %1178 = vmatprep.subr.mxu0 0.0
        %1179 = vmatpush1.msra.mxu0 0.0
        %1180 = vmatprep.subr.mxu0 0.0
        %1181 = vmatpush1.msra.mxu0 0.0
        %1182 = vmatprep.mubr.f32.mxu0 0.0
        %1183 = vmatmul.mubr.f32.gmra.mrb[0].mxu0 %v1116
        %v1184 = vpop.f32.mrb[0].mxu0
        %v1185 = vadd.f32 %v348, %v1184
        %v1186 = vpop.f32.mrb[0].mxu0
        %1187 = vdwg.mxu0
        %v1188 = vsel %vm353, %v1185, 0.0
        %1189 = vadd.xlane.f32.xlu0 %v1188
        %v1190 = vpop.xlane.xlu0 %1189
        %v1191 = vrcp.pop 32.0
        %v1192 = vmul.f32 %v1190, %v1191
        %v1193 = vsub.f32 %v1185, %v1192
        %v1194 = vmul.f32 %v1193, %v1193
        %v1195 = vsel %vm353, %v1194, 0.0
        %1196 = vadd.xlane.f32.xlu0 %v1195
        %v1197 = vpop.xlane.xlu0 %1196
        %v1198 = vmul.f32 %v1197, %v1191
        %v1199 = vadd.f32 %v1198, 1e-05
        %v1200 = vrsqrt.pop %v1199
        %v1201 = vmul.f32 %v1193, %v1200
        %v1202 = vld [vmem:[%s3] sm:$0x1]
        %v1204 = vlaneseq
        %v1205 = vshrl.u32 %v1204, 7
        %v1206 = vsub.s32 0, %v1205
        %v1207 = vrot.slane %v1202, %v1206
        %v1209 = vmul.f32 %v1201, %v1207
        %v1210 = vld [vmem:[%s4] sm:$0x1]
        %v1212 = vlaneseq
        %v1213 = vshrl.u32 %v1212, 7
        %v1214 = vsub.s32 0, %v1213
        %v1215 = vrot.slane %v1210, %v1214
        %v1217 = vadd.f32 %v1209, %v1215
        %v1218 = vld [vmem:[%s5] sm:$0xff]
        %v1219 = vld [vmem:[%s5 + $0x8] sm:$0xff]
        %v1220 = vld [vmem:[%s5 + $0x10] sm:$0xff]
        %v1221 = vld [vmem:[%s5 + $0x18] sm:$0xff]
        %v1222 = vld [vmem:[%s6] sm:$0x1]
        %v1224 = vlaneseq
        %v1225 = vshrl.u32 %v1224, 7
        %v1226 = vsub.s32 0, %v1225
        %v1227 = vrot.slane %v1222, %v1226
        %v1230 = vsel %vm353, %v1217, 0
        %1232 = vmatprep.subr.mxu0 0.0
        %1233 = vmatpush1.msra.mxu0 %v1218
        %1234 = vmatprep.subr.mxu0 0.0
        %1235 = vmatpush1.msra.mxu0 %v1219
        %1236 = vmatprep.subr.mxu0 0.0
        %1237 = vmatpush1.msra.mxu0 %v1220
        %1238 = vmatprep.subr.mxu0 0.0
        %1239 = vmatpush1.msra.mxu0 %v1221
        %1240 = vmatprep.subr.mxu0 0.0
        %1241 = vmatpush1.msra.mxu0 0.0
        %1242 = vmatprep.subr.mxu0 0.0
        %1243 = vmatpush1.msra.mxu0 0.0
        %1244 = vmatprep.subr.mxu0 0.0
        %1245 = vmatpush1.msra.mxu0 0.0
        %1246 = vmatprep.subr.mxu0 0.0
        %1247 = vmatpush1.msra.mxu0 0.0
        %1248 = vmatprep.subr.mxu0 0.0
        %1249 = vmatpush1.msra.mxu0 0.0
        %1250 = vmatprep.subr.mxu0 0.0
        %1251 = vmatpush1.msra.mxu0 0.0
        %1252 = vmatprep.subr.mxu0 0.0
        %1253 = vmatpush1.msra.mxu0 0.0
        %1254 = vmatprep.subr.mxu0 0.0
        %1255 = vmatpush1.msra.mxu0 0.0
        %1256 = vmatprep.subr.mxu0 0.0
        %1257 = vmatpush1.msra.mxu0 0.0
        %1258 = vmatprep.subr.mxu0 0.0
        %1259 = vmatpush1.msra.mxu0 0.0
        %1260 = vmatprep.subr.mxu0 0.0
        %1261 = vmatpush1.msra.mxu0 0.0
        %1262 = vmatprep.subr.mxu0 0.0
        %1263 = vmatpush1.msra.mxu0 0.0
        %1264 = vmatprep.subr.mxu0 0.0
        %1265 = vmatpush1.msra.mxu0 0.0
        %1266 = vmatprep.subr.mxu0 0.0
        %1267 = vmatpush1.msra.mxu0 0.0
        %1268 = vmatprep.subr.mxu0 0.0
        %1269 = vmatpush1.msra.mxu0 0.0
        %1270 = vmatprep.subr.mxu0 0.0
        %1271 = vmatpush1.msra.mxu0 0.0
        %1272 = vmatprep.subr.mxu0 0.0
        %1273 = vmatpush1.msra.mxu0 0.0
        %1274 = vmatprep.subr.mxu0 0.0
        %1275 = vmatpush1.msra.mxu0 0.0
        %1276 = vmatprep.subr.mxu0 0.0
        %1277 = vmatpush1.msra.mxu0 0.0
        %1278 = vmatprep.subr.mxu0 0.0
        %1279 = vmatpush1.msra.mxu0 0.0
        %1280 = vmatprep.subr.mxu0 0.0
        %1281 = vmatpush1.msra.mxu0 0.0
        %1282 = vmatprep.subr.mxu0 0.0
        %1283 = vmatpush1.msra.mxu0 0.0
        %1284 = vmatprep.subr.mxu0 0.0
        %1285 = vmatpush1.msra.mxu0 0.0
        %1286 = vmatprep.subr.mxu0 0.0
        %1287 = vmatpush1.msra.mxu0 0.0
        %1288 = vmatprep.subr.mxu0 0.0
        %1289 = vmatpush1.msra.mxu0 0.0
        %1290 = vmatprep.subr.mxu0 0.0
        %1291 = vmatpush1.msra.mxu0 0.0
        %1292 = vmatprep.subr.mxu0 0.0
        %1293 = vmatpush1.msra.mxu0 0.0
        %1294 = vmatprep.subr.mxu0 0.0
        %1295 = vmatpush1.msra.mxu0 0.0
        %1296 = vmatprep.mubr.f32.mxu0 0.0
        %1297 = vmatmul.mubr.f32.gmra.mrb[0].mxu0 %v1230
        %v1298 = vpop.f32.mrb[0].mxu0
        %v1299 = vadd.f32 %v1227, %v1298
        %v1300 = vpop.f32.mrb[0].mxu0
        %1301 = vdwg.mxu0
        %v1302 = vmul.f32 %v1299, 0.5
        %v1303 = vmul.f32 %v1299, 0.70710677
        %vm1304 = vcmp.ge.f32.partialorder %v1303, 0.0
        %v1305 = vsel %vm1304, 1.0, -1.0
        %v1306 = vand.u32 2147483647, %v1303
        %v1307 = vmul.f32 %v1306, 0.3275911
        %v1308 = vadd.f32 %v1307, 1.0
        %v1309 = vrcp.pop %v1308
        %v1310 = vmul.f32 1.0, %v1309
        %v1311 = vmul.f32 %v1310, 1.0614054
        %v1312 = vadd.f32 %v1311, -1.4531521
        %v1313 = vmul.f32 %v1312, %v1310
        %v1314 = vadd.f32 %v1313, 1.4214138
        %v1315 = vmul.f32 %v1314, %v1310
        %v1316 = vadd.f32 %v1315, -0.28449672
        %v1317 = vmul.f32 %v1316, %v1310
        %v1318 = vadd.f32 %v1317, 0.2548296
        %v1319 = vmul.f32 %v1318, %v1310
        %v1320 = vsub.f32 0.0, %v1306
        %v1321 = vmul.f32 %v1320, %v1306
        %v1322 = vmul.f32 %v1321, 1.442695
        %v1323 = vpow.pop %v1322
        %v1324 = vmul.f32 %v1319, %v1323
        %v1325 = vsub.f32 1.0, %v1324
        %v1326 = vmul.f32 %v1305, %v1325
        %v1327 = vadd.f32 %v1326, 1.0
        %v1328 = vmul.f32 %v1302, %v1327
        %v1329 = vld [vmem:[%s7] sm:$0xff]
        %v1330 = vld [vmem:[%s7 + $0x8] sm:$0xff]
        %v1331 = vld [vmem:[%s7 + $0x10] sm:$0xff]
        %v1332 = vld [vmem:[%s7 + $0x18] sm:$0xff]
        %v1333 = vld [vmem:[%s7 + $0x20] sm:$0xff]
        %v1334 = vld [vmem:[%s7 + $0x28] sm:$0xff]
        %v1335 = vld [vmem:[%s7 + $0x30] sm:$0xff]
        %v1336 = vld [vmem:[%s7 + $0x38] sm:$0xff]
        %v1337 = vld [vmem:[%s8] sm:$0x1]
        %v1339 = vlaneseq
        %v1340 = vshrl.u32 %v1339, 7
        %v1341 = vsub.s32 0, %v1340
        %v1342 = vrot.slane %v1337, %v1341
        %vm1344 = vcmask 523264
        %v1346 = vsel %vm1344, %v1328, 0
        %1348 = vmatprep.subr.mxu0 0.0
        %1349 = vmatpush1.msra.mxu0 %v1329
        %1350 = vmatprep.subr.mxu0 0.0
        %1351 = vmatpush1.msra.mxu0 %v1330
        %1352 = vmatprep.subr.mxu0 0.0
        %1353 = vmatpush1.msra.mxu0 %v1331
        %1354 = vmatprep.subr.mxu0 0.0
        %1355 = vmatpush1.msra.mxu0 %v1332
        %1356 = vmatprep.subr.mxu0 0.0
        %1357 = vmatpush1.msra.mxu0 %v1333
        %1358 = vmatprep.subr.mxu0 0.0
        %1359 = vmatpush1.msra.mxu0 %v1334
        %1360 = vmatprep.subr.mxu0 0.0
        %1361 = vmatpush1.msra.mxu0 %v1335
        %1362 = vmatprep.subr.mxu0 0.0
        %1363 = vmatpush1.msra.mxu0 %v1336
        %1364 = vmatprep.subr.mxu0 0.0
        %1365 = vmatpush1.msra.mxu0 0.0
        %1366 = vmatprep.subr.mxu0 0.0
        %1367 = vmatpush1.msra.mxu0 0.0
        %1368 = vmatprep.subr.mxu0 0.0
        %1369 = vmatpush1.msra.mxu0 0.0
        %1370 = vmatprep.subr.mxu0 0.0
        %1371 = vmatpush1.msra.mxu0 0.0
        %1372 = vmatprep.subr.mxu0 0.0
        %1373 = vmatpush1.msra.mxu0 0.0
        %1374 = vmatprep.subr.mxu0 0.0
        %1375 = vmatpush1.msra.mxu0 0.0
        %1376 = vmatprep.subr.mxu0 0.0
        %1377 = vmatpush1.msra.mxu0 0.0
        %1378 = vmatprep.subr.mxu0 0.0
        %1379 = vmatpush1.msra.mxu0 0.0
        %1380 = vmatprep.subr.mxu0 0.0
        %1381 = vmatpush1.msra.mxu0 0.0
        %1382 = vmatprep.subr.mxu0 0.0
        %1383 = vmatpush1.msra.mxu0 0.0
        %1384 = vmatprep.subr.mxu0 0.0
        %1385 = vmatpush1.msra.mxu0 0.0
        %1386 = vmatprep.subr.mxu0 0.0
        %1387 = vmatpush1.msra.mxu0 0.0
        %1388 = vmatprep.subr.mxu0 0.0
        %1389 = vmatpush1.msra.mxu0 0.0
        %1390 = vmatprep.subr.mxu0 0.0
        %1391 = vmatpush1.msra.mxu0 0.0
        %1392 = vmatprep.subr.mxu0 0.0
        %1393 = vmatpush1.msra.mxu0 0.0
        %1394 = vmatprep.subr.mxu0 0.0
        %1395 = vmatpush1.msra.mxu0 0.0
        %1396 = vmatprep.subr.mxu0 0.0
        %1397 = vmatpush1.msra.mxu0 0.0
        %1398 = vmatprep.subr.mxu0 0.0
        %1399 = vmatpush1.msra.mxu0 0.0
        %1400 = vmatprep.subr.mxu0 0.0
        %1401 = vmatpush1.msra.mxu0 0.0
        %1402 = vmatprep.subr.mxu0 0.0
        %1403 = vmatpush1.msra.mxu0 0.0
        %1404 = vmatprep.subr.mxu0 0.0
        %1405 = vmatpush1.msra.mxu0 0.0
        %1406 = vmatprep.subr.mxu0 0.0
        %1407 = vmatpush1.msra.mxu0 0.0
        %1408 = vmatprep.subr.mxu0 0.0
        %1409 = vmatpush1.msra.mxu0 0.0
        %1410 = vmatprep.subr.mxu0 0.0
        %1411 = vmatpush1.msra.mxu0 0.0
        %1412 = vmatprep.mubr.f32.mxu0 0.0
        %1413 = vmatmul.mubr.f32.gmra.mrb[0].mxu0 %v1346
        %v1414 = vpop.f32.mrb[0].mxu0
        %v1415 = vadd.f32 %v1342, %v1414
        %v1416 = vpop.f32.mrb[0].mxu0
        %1417 = vdwg.mxu0
        %v1418 = vadd.f32 %v1415, %v1185
        %1419 = vst.msk [vmem:[%s347] sm:$0xff] %vm353, %v1418
        %s1420 = sand.u32 %s228, 1
        %s1421 = scalar_lea.sflag [#allocation5], %s1420
        %s1422 = sand.u32 %s228, 1
        %s1423 = smul.addr %s1422, 8
        %s1424 = scalar_lea.vmem [#allocation6], %s1423
        // Predicated region
        $region61: #{tpu_custom_call.1} parent=55 // pred_check
          %p1425 = pneg %p238
        $region62: #{tpu_custom_call.1} parent=55 // pred_check_branch
          %1427 = sbr.rel (%p1425) target = $region64
        $region63: #{tpu_custom_call.1} parent=55 // pred_region
          %s1429 = ssub.s32 128, 128
          %1430 = vsyncadd %s1421, %s1429
          %s1431 = smul.addr %s26, 128
          %s1432 = scalar_lea.hbm %s9, %s1431
          %s1434 = sshll.u32 %s1424, 4
          %s1435 = int_to_ptr.vmem [resolvable:$true] %s1434
          %1437 = dma.vmem_to_hbm [thread:$0]  %s1435, 128, %s1432, %s1421
        $region64: #{tpu_custom_call.1} parent=55 // pred_fallthru
          _
      $region56: #{tpu_custom_call.1} parent=5 // pred_fallthru
        _
      %p1438 = scmp.le.s32.totalorder 2, %s21
      // Predicated region
      $region65: #{tpu_custom_call.1} parent=5 // pred_check
        %p1439 = pneg %p1438
      $region66: #{tpu_custom_call.1} parent=5 // pred_check_branch
        %1441 = sbr.rel (%p1439) target = $region68
      $region67: #{tpu_custom_call.1} parent=5 // pred_region
        %s1442 = ssub.s32 %s21, 2
        // Predicated region
        $region69: #{tpu_custom_call.1} parent=67 // pred_check
          %p1443 = pneg %p244
        $region70: #{tpu_custom_call.1} parent=67 // pred_check_branch
          %1445 = sbr.rel (%p1443) target = $region72
        $region71: #{tpu_custom_call.1} parent=67 // pred_region
          %s1446 = sand.u32 %s229, 1
          %s1447 = scalar_lea.sflag [#allocation5], %s1446
          %s1448 = sand.u32 %s229, 1
          %s1449 = smul.addr %s1448, 8
          %s1450 = scalar_lea.vmem [#allocation6], %s1449
          %1451 = dma.done %s1447, 128
        $region72: #{tpu_custom_call.1} parent=67 // pred_fallthru
          _
      $region68: #{tpu_custom_call.1} parent=5 // pred_fallthru
        _
    $region6: #{tpu_custom_call.1} parent=1 // loop_footer
      %s25 = sadd.s32 1, %s21
    $region7: #{tpu_custom_call.1} parent=1 // loop_footer_branch
      %20 = sbr.rel target = $region3
    $region8: #{tpu_custom_call.1} parent=1 // loop_exit
      _
    %1452 = vsyncpa [#allocation4], 1
    %s1453 = scalar_lea.sflag [#allocation4], 1
    %1454 = vsyncpa %s1453, 1
    %1455 = vsyncpa [#allocation5], 1
    %s1456 = scalar_lea.sflag [#allocation5], 1
    %1457 = vsyncpa %s1456, 1

</llo_original>
